<compile_context>
chip_gen: v7x
topology: tpu7x:2x2x1
jax: 0.10.0
libtpu: 0.0.40
codegen_flags: <defaults>
</compile_context>

<pallas_src>
import functools
import math

import jax
import jax.numpy as jnp
import numpy as np
from jax import lax
from jax.experimental import pallas as pl
from jax.experimental.pallas import tpu as pltpu


# ----------------------------------------------------------------------------
# Static (trace-time) tap bookkeeping for the stride-phase decomposition of
# ConvTranspose2d:
#   out[n, co, s*q+ph, s*r+pw] =
#     sum_{taps (kh,kw) of phase (ph,pw)} sum_ci W[ci,co,kh,kw] * y1[n,ci,q+dh,r+dw]
# with dh = (ph + padding - kh)/s, dw = (pw + padding - kw)/s (integer only).
# ----------------------------------------------------------------------------
def _build_phase_plan(K, stride, padding):
    plan = []
    for ph in range(stride):
        for pw in range(stride):
            taps = []
            for kh in range(K):
                if (ph + padding - kh) % stride:
                    continue
                dh = (ph + padding - kh) // stride
                for kw in range(K):
                    if (pw + padding - kw) % stride:
                        continue
                    dw = (pw + padding - kw) // stride
                    taps.append((kh, kw, dh, dw))
            plan.append(taps)
    return plan


# ----------------------------------------------------------------------------
# Fused Pallas kernel: conv1+BN+ReLU -> phase-decomposed tp_conv+BN+ReLU
#                      -> conv2+BN+ReLU, all VMEM/vreg-resident.
# Layout: channels on sublanes, flattened spatial M = N*H*W on lanes; the s^2
# phase slabs of stages 2/3 are concatenated along the lane axis.
# ----------------------------------------------------------------------------
def _decoder_kernel(x_ref, q_ref, r_ref,
                    w1_ref, g1_ref, b1_ref,
                    w2p_ref, g2_ref, b2_ref,
                    w3_ref, g3_ref, b3_ref,
                    out_ref, *, eps, H, W, shifts):
    M1 = x_ref.shape[1]
    n_phase = w2p_ref.shape[0]

    # ---- stage 1: 1x1 conv + BN(train, two-pass) + ReLU ---------------------
    z1 = jnp.dot(w1_ref[...], x_ref[...],
                 preferred_element_type=jnp.float32)             # (mid, M1)
    mean1 = jnp.sum(z1, axis=1, keepdims=True) * (1.0 / M1)
    c1 = z1 - mean1
    var1 = jnp.sum(c1 * c1, axis=1, keepdims=True) * (1.0 / M1)
    sc1 = g1_ref[...] * lax.rsqrt(var1 + eps)                    # EUP
    y1 = jnp.maximum(c1 * sc1 + b1_ref[...], 0.0)

    # ---- stage 2: ConvTranspose2d via stride-phase decomposition ------------
    # Distinct (dh, dw) shifts -> rolled + boundary-masked views of y1.
    # Correctness of roll+mask: a VALID tap read (q+dh in [0,H), r+dw in [0,W))
    # stays at flat index n*H*W + (q+dh)*W + (r+dw), i.e. inside the same
    # image and inside [0, M1); every position the circular wrap could corrupt
    # has q+dh or r+dw out of range and is therefore zeroed by the mask.
    q_idx = q_ref[...]                                           # (1, M1) int32
    r_idx = r_ref[...]                                           # (1, M1) int32
    tap_stack = []
    for (dh, dw) in shifts:
        off = dh * W + dw
        t = y1 if off == 0 else pltpu.roll(y1, shift=(-off) % M1, axis=1)
        conds = []
        if dh > 0:
            conds.append(q_idx < (H - dh))
        if dh < 0:
            conds.append(q_idx >= (-dh))
        if dw > 0:
            conds.append(r_idx < (W - dw))
        if dw < 0:
            conds.append(r_idx >= (-dw))
        if conds:                       # (0,0) shift: all valid, no mask mult
            valid = conds[0]
            for c in conds[1:]:
                valid = jnp.logical_and(valid, c)
            t = t * valid.astype(jnp.float32)
        tap_stack.append(t)
    ystack = (jnp.concatenate(tap_stack, axis=0)
              if len(tap_stack) > 1 else tap_stack[0])           # (n_shift*mid, M1)

    # One dot per phase (K = n_shift*mid), phases concatenated along lanes.
    z2 = jnp.concatenate(
        [jnp.dot(w2p_ref[p], ystack, preferred_element_type=jnp.float32)
         for p in range(n_phase)], axis=1)                       # (mid, n_phase*M1)

    M2 = n_phase * M1
    mean2 = jnp.sum(z2, axis=1, keepdims=True) * (1.0 / M2)
    c2 = z2 - mean2
    var2 = jnp.sum(c2 * c2, axis=1, keepdims=True) * (1.0 / M2)
    sc2 = g2_ref[...] * lax.rsqrt(var2 + eps)
    y2 = jnp.maximum(c2 * sc2 + b2_ref[...], 0.0)

    # ---- stage 3: 1x1 conv + BN + ReLU, single pass, single store -----------
    z3 = jnp.dot(w3_ref[...], y2,
                 preferred_element_type=jnp.float32)             # (Cout, M2)
    mean3 = jnp.sum(z3, axis=1, keepdims=True) * (1.0 / M2)
    c3 = z3 - mean3
    var3 = jnp.sum(c3 * c3, axis=1, keepdims=True) * (1.0 / M2)
    sc3 = g3_ref[...] * lax.rsqrt(var3 + eps)
    out_ref[...] = jnp.maximum(c3 * sc3 + b3_ref[...], 0.0)


# ----------------------------------------------------------------------------
# Decoder forward (Pallas path)
# ----------------------------------------------------------------------------
def decoder_forward(x_nchw, p, *, kernel_size, stride, padding, output_padding,
                    eps=1e-5):
    N, Cin, H, W = x_nchw.shape
    K, s = kernel_size, stride
    mid = p["w1"].shape[0]
    Cout = p["w3"].shape[0]
    OH = (H - 1) * s - 2 * padding + K + output_padding
    OW = (W - 1) * s - 2 * padding + K + output_padding
    # Fused kernel assumes every stride-phase of the output covers exactly HxW
    # pixels per image (true whenever K + output_padding - 2*padding == stride).
    assert OH == s * H and OW == s * W, "config not supported by fused kernel"
    # TODO(synk): general OH % stride != 0 configs need per-phase output sizes.

    M1 = N * H * W
    plan = _build_phase_plan(K, s, padding)

    # Distinct (dh, dw) shifts, in stable order (static, trace-time).
    shifts = []
    for taps in plan:
        for (_, _, dh, dw) in taps:
            if (dh, dw) not in shifts:
                shifts.append((dh, dw))
    n_shift = len(shifts)
    sidx = {sh: j for j, sh in enumerate(shifts)}

    # Per-phase stacked ConvTranspose weights: (s*s, mid, n_shift*mid) where
    # column block j holds the (Cout_mid x Cin_mid) tap weight for shift j
    # (zero if that shift does not contribute to the phase).
    wt = p["wt"]                                      # (mid_in, mid_out, K, K)
    w2_blocks = []
    for taps in plan:
        cols = [jnp.zeros((mid, mid), jnp.float32) for _ in range(n_shift)]
        for (kh, kw, dh, dw) in taps:
            j = sidx[(dh, dw)]
            cols[j] = cols[j] + wt[:, :, kh, kw].T
        w2_blocks.append(jnp.concatenate(cols, axis=1))
    w2p = jnp.stack(w2_blocks, axis=0)                # (s*s, mid, n_shift*mid)

    # Tiny (1, M1) int32 per-lane row/col index maps for in-kernel masks.
    qq, rr = np.meshgrid(np.arange(H), np.arange(W), indexing="ij")
    q_map = jnp.asarray(np.tile(qq.reshape(-1), N).astype(np.int32)).reshape(1, M1)
    r_map = jnp.asarray(np.tile(rr.reshape(-1), N).astype(np.int32)).reshape(1, M1)

    # Channels-on-sublanes / flattened-spatial-on-lanes input layout.
    x2d = jnp.transpose(x_nchw, (1, 0, 2, 3)).reshape(Cin, M1).astype(jnp.float32)

    kernel = functools.partial(_decoder_kernel, eps=eps, H=H, W=W,
                               shifts=tuple(shifts))

    out2d = pl.pallas_call(
        kernel,
        out_shape=jax.ShapeDtypeStruct((Cout, s * s * M1), jnp.float32),
    )(x2d, q_map, r_map,
      p["w1"], p["g1"].reshape(mid, 1), p["b1"].reshape(mid, 1),
      w2p, p["g2"].reshape(mid, 1), p["b2"].reshape(mid, 1),
      p["w3"], p["g3"].reshape(Cout, 1), p["b3"].reshape(Cout, 1))

    # Depth-to-space (phase interleave) + back to NCHW: plain-JAX glue.
    out = out2d.reshape(Cout, s, s, N, H, W)
    out = jnp.transpose(out, (3, 0, 4, 1, 5, 2)).reshape(N, Cout, OH, OW)
    return out


# ----------------------------------------------------------------------------
# Parameter init (deterministic, matches PyTorch module shapes; bias=False)
# ----------------------------------------------------------------------------
def init_decoder_params(key, in_planes, out_planes, kernel_size):
    mid = in_planes // 4
    K = kernel_size
    ks = jax.random.split(key, 9)
    w1 = jax.random.normal(ks[0], (mid, in_planes, 1, 1), jnp.float32) \
        * (1.0 / math.sqrt(in_planes))                       # Conv2d OIHW
    wt = jax.random.normal(ks[1], (mid, mid, K, K), jnp.float32) \
        * (1.0 / math.sqrt(mid * K * K))                     # ConvTranspose IOHW
    w3 = jax.random.normal(ks[2], (out_planes, mid, 1, 1), jnp.float32) \
        * (1.0 / math.sqrt(mid))                             # Conv2d OIHW
    g1 = 1.0 + 0.1 * jax.random.normal(ks[3], (mid,), jnp.float32)
    b1 = 0.1 * jax.random.normal(ks[4], (mid,), jnp.float32)
    g2 = 1.0 + 0.1 * jax.random.normal(ks[5], (mid,), jnp.float32)
    b2 = 0.1 * jax.random.normal(ks[6], (mid,), jnp.float32)
    g3 = 1.0 + 0.1 * jax.random.normal(ks[7], (out_planes,), jnp.float32)
    b3 = 0.1 * jax.random.normal(ks[8], (out_planes,), jnp.float32)
    return {
        # torch-layout weights (for the pure-JAX reference)
        "w1_t": w1, "wt": wt, "w3_t": w3,
        # kernel-layout 1x1 weights: (Cout, Cin)
        "w1": w1[:, :, 0, 0], "w3": w3[:, :, 0, 0],
        "g1": g1, "b1": b1, "g2": g2, "b2": b2, "g3": g3, "b3": b3,
    }


# ----------------------------------------------------------------------------
# Pure-JAX reference (lax convs + training-mode BN) for correctness check
# ----------------------------------------------------------------------------
def _bn_relu_ref(x, gamma, beta, eps=1e-5):
    mean = jnp.mean(x, axis=(0, 2, 3), keepdims=True)
    var = jnp.mean((x - mean) ** 2, axis=(0, 2, 3), keepdims=True)
    y = (x - mean) / jnp.sqrt(var + eps) * gamma[None, :, None, None] \
        + beta[None, :, None, None]
    return jnp.maximum(y, 0.0)


def decoder_reference(x, p, *, kernel_size, stride, padding, output_padding):
    K = kernel_size
    dn1 = lax.conv_dimension_numbers(x.shape, p["w1_t"].shape,
                                     ("NCHW", "OIHW", "NCHW"))
    y = lax.conv_general_dilated(x, p["w1_t"], (1, 1), "VALID",
                                 dimension_numbers=dn1)
    y = _bn_relu_ref(y, p["g1"], p["b1"])

    dn_t = lax.conv_dimension_numbers(y.shape, p["wt"].shape,
                                      ("NCHW", "IOHW", "NCHW"))
    pad = (K - 1 - padding, K - 1 - padding + output_padding)
    y = lax.conv_general_dilated(y, jnp.flip(p["wt"], (2, 3)), (1, 1),
                                 [pad, pad], lhs_dilation=(stride, stride),
                                 dimension_numbers=dn_t)
    y = _bn_relu_ref(y, p["g2"], p["b2"])

    dn2 = lax.conv_dimension_numbers(y.shape, p["w3_t"].shape,
                                     ("NCHW", "OIHW", "NCHW"))
    y = lax.conv_general_dilated(y, p["w3_t"], (1, 1), "VALID",
                                 dimension_numbers=dn2)
    return _bn_relu_ref(y, p["g3"], p["b3"])


if __name__ == "__main__":
    # Small LinkNet-style decoder config.
    in_planes, out_planes = 16, 8
    kernel_size, stride, padding, output_padding = 3, 2, 1, 1
    N, H, W = 2, 16, 16

    key = jax.random.PRNGKey(0)
    k_x, k_p = jax.random.split(key)
    x = jax.random.normal(k_x, (N, in_planes, H, W), jnp.float32)
    params = init_decoder_params(k_p, in_planes, out_planes, kernel_size)

    fwd = jax.jit(functools.partial(
        decoder_forward, kernel_size=kernel_size, stride=stride,
        padding=padding, output_padding=output_padding))
    out = fwd(x, params)
    jax.block_until_ready(out)

    OH = (H - 1) * stride - 2 * padding + kernel_size + output_padding
    assert out.shape == (N, out_planes, OH, OH), out.shape

    ref = decoder_reference(x, params, kernel_size=kernel_size, stride=stride,
                            padding=padding, output_padding=output_padding)
    max_err = float(jnp.max(jnp.abs(out - ref)))
    if not bool(jnp.allclose(out, ref, atol=2e-4, rtol=2e-4)):
        raise AssertionError(f"Pallas decoder mismatch, max abs err = {max_err}")

    # TODO(synk): BatchNorm running_mean/running_var buffer updates (a training
    # side effect that does not change the forward output) are not modeled.
    print("KERNEL_OK")
</pallas_src>

<mosaic_0001>
module attributes {stable_mosaic.version = 11 : i64} {
  func.func @_decoder_kernel(%arg0: memref<16x512xf32, #tpu.memory_space<vmem>>, %arg1: memref<1x512xi32, #tpu.memory_space<vmem>>, %arg2: memref<1x512xi32, #tpu.memory_space<vmem>>, %arg3: memref<4x16xf32, #tpu.memory_space<vmem>>, %arg4: memref<4x1xf32, #tpu.memory_space<vmem>>, %arg5: memref<4x1xf32, #tpu.memory_space<vmem>>, %arg6: memref<4x4x16xf32, #tpu.memory_space<vmem>>, %arg7: memref<4x1xf32, #tpu.memory_space<vmem>>, %arg8: memref<4x1xf32, #tpu.memory_space<vmem>>, %arg9: memref<8x4xf32, #tpu.memory_space<vmem>>, %arg10: memref<8x1xf32, #tpu.memory_space<vmem>>, %arg11: memref<8x1xf32, #tpu.memory_space<vmem>>, %arg12: memref<8x2048xf32, #tpu.memory_space<vmem>>) attributes {dimension_semantics = [], scalar_prefetch = 0 : i64, scratch_operands = 0 : i64, tpu.core_type = #tpu.core_type<tc>} {
    %c0 = arith.constant 0 : index
    %c0_0 = arith.constant 0 : index
    %0 = vector.load %arg3[%c0, %c0_0] : memref<4x16xf32, #tpu.memory_space<vmem>>, vector<4x16xf32>
    %c0_1 = arith.constant 0 : index
    %c0_2 = arith.constant 0 : index
    %1 = vector.load %arg0[%c0_1, %c0_2] : memref<16x512xf32, #tpu.memory_space<vmem>>, vector<16x512xf32>
    %cst = arith.constant dense<0.000000e+00> : vector<4x512xf32>
    %2 = tpu.matmul %0, %1, %cst {dimension_numbers = #tpu.dot_dimension_numbers<[1], [0], [0], [1], [0, 0, 1, 1], [], []>} : vector<4x16xf32>, vector<16x512xf32>, vector<4x512xf32> -> vector<4x512xf32>
    %cst_3 = arith.constant dense<0.000000e+00> : vector<4xf32>
    %3 = vector.multi_reduction <add>, %2, %cst_3 [1] : vector<4x512xf32> to vector<4xf32>
    %4 = vector.shape_cast %3 : vector<4xf32> to vector<4x1xf32>
    %cst_4 = arith.constant 0.001953125 : f32
    %5 = vector.broadcast %cst_4 : f32 to vector<4x1xf32>
    %6 = arith.mulf %4, %5 : vector<4x1xf32>
    %7 = vector.broadcast %6 : vector<4x1xf32> to vector<4x512xf32>
    %8 = arith.subf %2, %7 : vector<4x512xf32>
    %9 = arith.mulf %8, %8 : vector<4x512xf32>
    %cst_5 = arith.constant dense<0.000000e+00> : vector<4xf32>
    %10 = vector.multi_reduction <add>, %9, %cst_5 [1] : vector<4x512xf32> to vector<4xf32>
    %11 = vector.shape_cast %10 : vector<4xf32> to vector<4x1xf32>
    %cst_6 = arith.constant 0.001953125 : f32
    %12 = vector.broadcast %cst_6 : f32 to vector<4x1xf32>
    %13 = arith.mulf %11, %12 : vector<4x1xf32>
    %c0_7 = arith.constant 0 : index
    %c0_8 = arith.constant 0 : index
    %14 = vector.load %arg4[%c0_7, %c0_8] : memref<4x1xf32, #tpu.memory_space<vmem>>, vector<4x1xf32>
    %cst_9 = arith.constant 9.99999974E-6 : f32
    %15 = vector.broadcast %cst_9 : f32 to vector<4x1xf32>
    %16 = arith.addf %13, %15 : vector<4x1xf32>
    %17 = math.rsqrt %16 : vector<4x1xf32>
    %18 = arith.mulf %14, %17 : vector<4x1xf32>
    %19 = vector.broadcast %18 : vector<4x1xf32> to vector<4x512xf32>
    %20 = arith.mulf %8, %19 : vector<4x512xf32>
    %c0_10 = arith.constant 0 : index
    %c0_11 = arith.constant 0 : index
    %21 = vector.load %arg5[%c0_10, %c0_11] : memref<4x1xf32, #tpu.memory_space<vmem>>, vector<4x1xf32>
    %22 = vector.broadcast %21 : vector<4x1xf32> to vector<4x512xf32>
    %23 = arith.addf %20, %22 : vector<4x512xf32>
    %cst_12 = arith.constant 0.000000e+00 : f32
    %24 = vector.broadcast %cst_12 : f32 to vector<4x512xf32>
    %25 = arith.maximumf %23, %24 : vector<4x512xf32>
    %c0_13 = arith.constant 0 : index
    %c0_14 = arith.constant 0 : index
    %26 = vector.load %arg1[%c0_13, %c0_14] : memref<1x512xi32, #tpu.memory_space<vmem>>, vector<1x512xi32>
    %c0_15 = arith.constant 0 : index
    %c0_16 = arith.constant 0 : index
    %27 = vector.load %arg2[%c0_15, %c0_16] : memref<1x512xi32, #tpu.memory_space<vmem>>, vector<1x512xi32>
    %c511_i32 = arith.constant 511 : i32
    %28 = tpu.dynamic_rotate %25 by %c511_i32 dim 1 : vector<4x512xf32>, i32 -> vector<4x512xf32>
    %c15_i32 = arith.constant 15 : i32
    %29 = vector.broadcast %c15_i32 : i32 to vector<1x512xi32>
    %30 = arith.cmpi slt, %27, %29 : vector<1x512xi32>
    %31 = arith.extui %30 : vector<1x512xi1> to vector<1x512xi32>
    %32 = arith.sitofp %31 : vector<1x512xi32> to vector<1x512xf32>
    %33 = vector.broadcast %32 : vector<1x512xf32> to vector<4x512xf32>
    %34 = arith.mulf %28, %33 : vector<4x512xf32>
    %c496_i32 = arith.constant 496 : i32
    %35 = tpu.dynamic_rotate %25 by %c496_i32 dim 1 : vector<4x512xf32>, i32 -> vector<4x512xf32>
    %c15_i32_17 = arith.constant 15 : i32
    %36 = vector.broadcast %c15_i32_17 : i32 to vector<1x512xi32>
    %37 = arith.cmpi slt, %26, %36 : vector<1x512xi32>
    %38 = arith.extui %37 : vector<1x512xi1> to vector<1x512xi32>
    %39 = arith.sitofp %38 : vector<1x512xi32> to vector<1x512xf32>
    %40 = vector.broadcast %39 : vector<1x512xf32> to vector<4x512xf32>
    %41 = arith.mulf %35, %40 : vector<4x512xf32>
    %c495_i32 = arith.constant 495 : i32
    %42 = tpu.dynamic_rotate %25 by %c495_i32 dim 1 : vector<4x512xf32>, i32 -> vector<4x512xf32>
    %c15_i32_18 = arith.constant 15 : i32
    %43 = vector.broadcast %c15_i32_18 : i32 to vector<1x512xi32>
    %44 = arith.cmpi slt, %26, %43 : vector<1x512xi32>
    %c15_i32_19 = arith.constant 15 : i32
    %45 = vector.broadcast %c15_i32_19 : i32 to vector<1x512xi32>
    %46 = arith.cmpi slt, %27, %45 : vector<1x512xi32>
    %47 = arith.andi %44, %46 : vector<1x512xi1>
    %48 = arith.extui %47 : vector<1x512xi1> to vector<1x512xi32>
    %49 = arith.sitofp %48 : vector<1x512xi32> to vector<1x512xf32>
    %50 = vector.broadcast %49 : vector<1x512xf32> to vector<4x512xf32>
    %51 = arith.mulf %42, %50 : vector<4x512xf32>
    %52 = tpu.concatenate %25, %34, %41, %51 in 0 : vector<4x512xf32>, vector<4x512xf32>, vector<4x512xf32>, vector<4x512xf32> -> vector<16x512xf32>
    %c0_20 = arith.constant 0 : index
    %c0_21 = arith.constant 0 : index
    %c0_22 = arith.constant 0 : index
    %53 = vector.load %arg6[%c0_20, %c0_21, %c0_22] : memref<4x4x16xf32, #tpu.memory_space<vmem>>, vector<1x4x16xf32>
    %54 = vector.shape_cast %53 : vector<1x4x16xf32> to vector<4x16xf32>
    %cst_23 = arith.constant dense<0.000000e+00> : vector<4x512xf32>
    %55 = tpu.matmul %54, %52, %cst_23 {dimension_numbers = #tpu.dot_dimension_numbers<[1], [0], [0], [1], [0, 0, 1, 1], [], []>} : vector<4x16xf32>, vector<16x512xf32>, vector<4x512xf32> -> vector<4x512xf32>
    %c1 = arith.constant 1 : index
    %c0_24 = arith.constant 0 : index
    %c0_25 = arith.constant 0 : index
    %56 = vector.load %arg6[%c1, %c0_24, %c0_25] : memref<4x4x16xf32, #tpu.memory_space<vmem>>, vector<1x4x16xf32>
    %57 = vector.shape_cast %56 : vector<1x4x16xf32> to vector<4x16xf32>
    %cst_26 = arith.constant dense<0.000000e+00> : vector<4x512xf32>
    %58 = tpu.matmul %57, %52, %cst_26 {dimension_numbers = #tpu.dot_dimension_numbers<[1], [0], [0], [1], [0, 0, 1, 1], [], []>} : vector<4x16xf32>, vector<16x512xf32>, vector<4x512xf32> -> vector<4x512xf32>
    %c2 = arith.constant 2 : index
    %c0_27 = arith.constant 0 : index
    %c0_28 = arith.constant 0 : index
    %59 = vector.load %arg6[%c2, %c0_27, %c0_28] : memref<4x4x16xf32, #tpu.memory_space<vmem>>, vector<1x4x16xf32>
    %60 = vector.shape_cast %59 : vector<1x4x16xf32> to vector<4x16xf32>
    %cst_29 = arith.constant dense<0.000000e+00> : vector<4x512xf32>
    %61 = tpu.matmul %60, %52, %cst_29 {dimension_numbers = #tpu.dot_dimension_numbers<[1], [0], [0], [1], [0, 0, 1, 1], [], []>} : vector<4x16xf32>, vector<16x512xf32>, vector<4x512xf32> -> vector<4x512xf32>
    %c3 = arith.constant 3 : index
    %c0_30 = arith.constant 0 : index
    %c0_31 = arith.constant 0 : index
    %62 = vector.load %arg6[%c3, %c0_30, %c0_31] : memref<4x4x16xf32, #tpu.memory_space<vmem>>, vector<1x4x16xf32>
    %63 = vector.shape_cast %62 : vector<1x4x16xf32> to vector<4x16xf32>
    %cst_32 = arith.constant dense<0.000000e+00> : vector<4x512xf32>
    %64 = tpu.matmul %63, %52, %cst_32 {dimension_numbers = #tpu.dot_dimension_numbers<[1], [0], [0], [1], [0, 0, 1, 1], [], []>} : vector<4x16xf32>, vector<16x512xf32>, vector<4x512xf32> -> vector<4x512xf32>
    %65 = tpu.concatenate %55, %58, %61, %64 in 1 : vector<4x512xf32>, vector<4x512xf32>, vector<4x512xf32>, vector<4x512xf32> -> vector<4x2048xf32>
    %cst_33 = arith.constant dense<0.000000e+00> : vector<4xf32>
    %66 = vector.multi_reduction <add>, %65, %cst_33 [1] : vector<4x2048xf32> to vector<4xf32>
    %67 = vector.shape_cast %66 : vector<4xf32> to vector<4x1xf32>
    %cst_34 = arith.constant 4.8828125E-4 : f32
    %68 = vector.broadcast %cst_34 : f32 to vector<4x1xf32>
    %69 = arith.mulf %67, %68 : vector<4x1xf32>
    %70 = vector.broadcast %69 : vector<4x1xf32> to vector<4x2048xf32>
    %71 = arith.subf %65, %70 : vector<4x2048xf32>
    %72 = arith.mulf %71, %71 : vector<4x2048xf32>
    %cst_35 = arith.constant dense<0.000000e+00> : vector<4xf32>
    %73 = vector.multi_reduction <add>, %72, %cst_35 [1] : vector<4x2048xf32> to vector<4xf32>
    %74 = vector.shape_cast %73 : vector<4xf32> to vector<4x1xf32>
    %cst_36 = arith.constant 4.8828125E-4 : f32
    %75 = vector.broadcast %cst_36 : f32 to vector<4x1xf32>
    %76 = arith.mulf %74, %75 : vector<4x1xf32>
    %c0_37 = arith.constant 0 : index
    %c0_38 = arith.constant 0 : index
    %77 = vector.load %arg7[%c0_37, %c0_38] : memref<4x1xf32, #tpu.memory_space<vmem>>, vector<4x1xf32>
    %cst_39 = arith.constant 9.99999974E-6 : f32
    %78 = vector.broadcast %cst_39 : f32 to vector<4x1xf32>
    %79 = arith.addf %76, %78 : vector<4x1xf32>
    %80 = math.rsqrt %79 : vector<4x1xf32>
    %81 = arith.mulf %77, %80 : vector<4x1xf32>
    %82 = vector.broadcast %81 : vector<4x1xf32> to vector<4x2048xf32>
    %83 = arith.mulf %71, %82 : vector<4x2048xf32>
    %c0_40 = arith.constant 0 : index
    %c0_41 = arith.constant 0 : index
    %84 = vector.load %arg8[%c0_40, %c0_41] : memref<4x1xf32, #tpu.memory_space<vmem>>, vector<4x1xf32>
    %85 = vector.broadcast %84 : vector<4x1xf32> to vector<4x2048xf32>
    %86 = arith.addf %83, %85 : vector<4x2048xf32>
    %cst_42 = arith.constant 0.000000e+00 : f32
    %87 = vector.broadcast %cst_42 : f32 to vector<4x2048xf32>
    %88 = arith.maximumf %86, %87 : vector<4x2048xf32>
    %c0_43 = arith.constant 0 : index
    %c0_44 = arith.constant 0 : index
    %89 = vector.load %arg9[%c0_43, %c0_44] : memref<8x4xf32, #tpu.memory_space<vmem>>, vector<8x4xf32>
    %cst_45 = arith.constant dense<0.000000e+00> : vector<8x2048xf32>
    %90 = tpu.matmul %89, %88, %cst_45 {dimension_numbers = #tpu.dot_dimension_numbers<[1], [0], [0], [1], [0, 0, 1, 1], [], []>} : vector<8x4xf32>, vector<4x2048xf32>, vector<8x2048xf32> -> vector<8x2048xf32>
    %cst_46 = arith.constant dense<0.000000e+00> : vector<8xf32>
    %91 = vector.multi_reduction <add>, %90, %cst_46 [1] : vector<8x2048xf32> to vector<8xf32>
    %92 = vector.shape_cast %91 : vector<8xf32> to vector<8x1xf32>
    %cst_47 = arith.constant 4.8828125E-4 : f32
    %93 = vector.broadcast %cst_47 : f32 to vector<8x1xf32>
    %94 = arith.mulf %92, %93 : vector<8x1xf32>
    %95 = vector.broadcast %94 : vector<8x1xf32> to vector<8x2048xf32>
    %96 = arith.subf %90, %95 : vector<8x2048xf32>
    %97 = arith.mulf %96, %96 : vector<8x2048xf32>
    %cst_48 = arith.constant dense<0.000000e+00> : vector<8xf32>
    %98 = vector.multi_reduction <add>, %97, %cst_48 [1] : vector<8x2048xf32> to vector<8xf32>
    %99 = vector.shape_cast %98 : vector<8xf32> to vector<8x1xf32>
    %cst_49 = arith.constant 4.8828125E-4 : f32
    %100 = vector.broadcast %cst_49 : f32 to vector<8x1xf32>
    %101 = arith.mulf %99, %100 : vector<8x1xf32>
    %c0_50 = arith.constant 0 : index
    %c0_51 = arith.constant 0 : index
    %102 = vector.load %arg10[%c0_50, %c0_51] : memref<8x1xf32, #tpu.memory_space<vmem>>, vector<8x1xf32>
    %cst_52 = arith.constant 9.99999974E-6 : f32
    %103 = vector.broadcast %cst_52 : f32 to vector<8x1xf32>
    %104 = arith.addf %101, %103 : vector<8x1xf32>
    %105 = math.rsqrt %104 : vector<8x1xf32>
    %106 = arith.mulf %102, %105 : vector<8x1xf32>
    %107 = vector.broadcast %106 : vector<8x1xf32> to vector<8x2048xf32>
    %108 = arith.mulf %96, %107 : vector<8x2048xf32>
    %c0_53 = arith.constant 0 : index
    %c0_54 = arith.constant 0 : index
    %109 = vector.load %arg11[%c0_53, %c0_54] : memref<8x1xf32, #tpu.memory_space<vmem>>, vector<8x1xf32>
    %110 = vector.broadcast %109 : vector<8x1xf32> to vector<8x2048xf32>
    %111 = arith.addf %108, %110 : vector<8x2048xf32>
    %cst_55 = arith.constant 0.000000e+00 : f32
    %112 = vector.broadcast %cst_55 : f32 to vector<8x2048xf32>
    %113 = arith.maximumf %111, %112 : vector<8x2048xf32>
    %c0_56 = arith.constant 0 : index
    %c0_57 = arith.constant 0 : index
    %114 = vector.load %arg12[%c0_56, %c0_57] : memref<8x2048xf32, #tpu.memory_space<vmem>>, vector<8x2048xf32>
    tpu.vector_store %arg12[%c0_56, %c0_57], %113 {strides = array<i32>} : memref<8x2048xf32, #tpu.memory_space<vmem>>, vector<8x2048xf32>,
    return
  }
}

</mosaic_0001>

<llo_original>
// kernel: decoder_forward.1
$region0: #{decoder_forward.1}
  #allocation0 [shape = 'u32[]', space=smem, size = 0x4, offset = 0x4, fixed_abs, tag = 'smem constant byte address 0x4 - core index']
  #allocation1 [shape = 'u32[144,128]{1,0:T(1,128)}', space=vmem, size = 0x12000, scoped, tag = 'internal scratch']
  %s0 = inlined_call_operand.vmem [shape: f32[16,512], index: 0, kind: input, shape index: {}]
  %s1 = inlined_call_operand.vmem [shape: s32[1,512], index: 1, kind: input, shape index: {}]
  %s2 = inlined_call_operand.vmem [shape: s32[1,512], index: 2, kind: input, shape index: {}]
  %s3 = inlined_call_operand.vmem [shape: f32[4,16], index: 3, kind: input, shape index: {}]
  %s4 = inlined_call_operand.vmem [shape: f32[4,1], index: 4, kind: input, shape index: {}]
  %s5 = inlined_call_operand.vmem [shape: f32[4,1], index: 5, kind: input, shape index: {}]
  %s6 = inlined_call_operand.vmem [shape: f32[4,4,16], index: 6, kind: input, shape index: {}]
  %s7 = inlined_call_operand.vmem [shape: f32[4,1], index: 7, kind: input, shape index: {}]
  %s8 = inlined_call_operand.vmem [shape: f32[4,1], index: 8, kind: input, shape index: {}]
  %s9 = inlined_call_operand.vmem [shape: f32[8,4], index: 9, kind: input, shape index: {}]
  %s10 = inlined_call_operand.vmem [shape: f32[8,1], index: 10, kind: input, shape index: {}]
  %s11 = inlined_call_operand.vmem [shape: f32[8,1], index: 11, kind: input, shape index: {}]
  %s12 = inlined_call_operand.vmem [shape: f32[8,2048], index: 12, kind: output, shape index: {}]
  %s13 = sld [smem:[#allocation0]]
  $region58: #{decoder_forward.1} parent=0
    _
  %s15 = ssub.s32 1, %s13
  %s16 = scalar_select 0, %s15, %s13
  // Predicated region
  $region2: #{decoder_forward.1} parent=0 // pred_check
    _
  $region3: #{decoder_forward.1} parent=0 // pred_check_branch
    %18 = sbr.rel (0) target = $region5
  $region4: #{decoder_forward.1} parent=0 // pred_region
    _
  $region5: #{decoder_forward.1} parent=0 // pred_fallthru
    _
  // Predicated region
  $region6: #{decoder_forward.1} parent=0 // pred_check
    _
  $region7: #{decoder_forward.1} parent=0 // pred_check_branch
    %20 = sbr.rel (0) target = $region9
  $region8: #{decoder_forward.1} parent=0 // pred_region
    _
  $region9: #{decoder_forward.1} parent=0 // pred_fallthru
    _
  // Predicated region
  $region10: #{decoder_forward.1} parent=0 // pred_check
    _
  $region11: #{decoder_forward.1} parent=0 // pred_check_branch
    %22 = sbr.rel (0) target = $region13
  $region12: #{decoder_forward.1} parent=0 // pred_region
    _
  $region13: #{decoder_forward.1} parent=0 // pred_fallthru
    _
  // Predicated region
  $region14: #{decoder_forward.1} parent=0 // pred_check
    _
  $region15: #{decoder_forward.1} parent=0 // pred_check_branch
    %24 = sbr.rel (0) target = $region17
  $region16: #{decoder_forward.1} parent=0 // pred_region
    _
  $region17: #{decoder_forward.1} parent=0 // pred_fallthru
    _
  // Predicated region
  $region18: #{decoder_forward.1} parent=0 // pred_check
    _
  $region19: #{decoder_forward.1} parent=0 // pred_check_branch
    %26 = sbr.rel (0) target = $region21
  $region20: #{decoder_forward.1} parent=0 // pred_region
    _
  $region21: #{decoder_forward.1} parent=0 // pred_fallthru
    _
  // Predicated region
  $region22: #{decoder_forward.1} parent=0 // pred_check
    _
  $region23: #{decoder_forward.1} parent=0 // pred_check_branch
    %28 = sbr.rel (0) target = $region25
  $region24: #{decoder_forward.1} parent=0 // pred_region
    _
  $region25: #{decoder_forward.1} parent=0 // pred_fallthru
    _
  // Predicated region
  $region26: #{decoder_forward.1} parent=0 // pred_check
    _
  $region27: #{decoder_forward.1} parent=0 // pred_check_branch
    %30 = sbr.rel (0) target = $region29
  $region28: #{decoder_forward.1} parent=0 // pred_region
    _
  $region29: #{decoder_forward.1} parent=0 // pred_fallthru
    _
  // Predicated region
  $region30: #{decoder_forward.1} parent=0 // pred_check
    _
  $region31: #{decoder_forward.1} parent=0 // pred_check_branch
    %32 = sbr.rel (0) target = $region33
  $region32: #{decoder_forward.1} parent=0 // pred_region
    _
  $region33: #{decoder_forward.1} parent=0 // pred_fallthru
    _
  // Predicated region
  $region34: #{decoder_forward.1} parent=0 // pred_check
    _
  $region35: #{decoder_forward.1} parent=0 // pred_check_branch
    %34 = sbr.rel (0) target = $region37
  $region36: #{decoder_forward.1} parent=0 // pred_region
    _
  $region37: #{decoder_forward.1} parent=0 // pred_fallthru
    _
  // Predicated region
  $region38: #{decoder_forward.1} parent=0 // pred_check
    _
  $region39: #{decoder_forward.1} parent=0 // pred_check_branch
    %36 = sbr.rel (0) target = $region41
  $region40: #{decoder_forward.1} parent=0 // pred_region
    _
  $region41: #{decoder_forward.1} parent=0 // pred_fallthru
    _
  // Predicated region
  $region42: #{decoder_forward.1} parent=0 // pred_check
    _
  $region43: #{decoder_forward.1} parent=0 // pred_check_branch
    %38 = sbr.rel (0) target = $region45
  $region44: #{decoder_forward.1} parent=0 // pred_region
    _
  $region45: #{decoder_forward.1} parent=0 // pred_fallthru
    _
  // Predicated region
  $region46: #{decoder_forward.1} parent=0 // pred_check
    _
  $region47: #{decoder_forward.1} parent=0 // pred_check_branch
    %40 = sbr.rel (0) target = $region49
  $region48: #{decoder_forward.1} parent=0 // pred_region
    _
  $region49: #{decoder_forward.1} parent=0 // pred_fallthru
    _
  %v41 = vld [vmem:[%s3] sm:$0xf]
  %v42 = vld [vmem:[%s0] sm:$0xff]
  %v43 = vld [vmem:[%s0 + $0x8] sm:$0xff]
  %v44 = vld [vmem:[%s0 + $0x10] sm:$0xff]
  %v45 = vld [vmem:[%s0 + $0x18] sm:$0xff]
  %v46 = vld [vmem:[%s0 + $0x20] sm:$0xff]
  %v47 = vld [vmem:[%s0 + $0x28] sm:$0xff]
  %v48 = vld [vmem:[%s0 + $0x30] sm:$0xff]
  %v49 = vld [vmem:[%s0 + $0x38] sm:$0xff]
  %vm50 = vcmask 130048
  %v52 = vsel %vm50, %v41, 0
  %54 = vmatprep.subr.mxu0 %v43
  %55 = vmatpush1.msra.mxu0 %v42
  %56 = vmatprep.subr.mxu0 %v47
  %57 = vmatpush1.msra.mxu0 %v46
  %58 = vmatprep.subr.mxu0 0.0
  %59 = vmatpush1.msra.mxu0 0.0
  %60 = vmatprep.subr.mxu0 0.0
  %61 = vmatpush1.msra.mxu0 0.0
  %62 = vmatprep.subr.mxu0 0.0
  %63 = vmatpush1.msra.mxu0 0.0
  %64 = vmatprep.subr.mxu0 0.0
  %65 = vmatpush1.msra.mxu0 0.0
  %66 = vmatprep.subr.mxu0 0.0
  %67 = vmatpush1.msra.mxu0 0.0
  %68 = vmatprep.subr.mxu0 0.0
  %69 = vmatpush1.msra.mxu0 0.0
  %70 = vmatprep.subr.mxu0 0.0
  %71 = vmatpush1.msra.mxu0 0.0
  %72 = vmatprep.subr.mxu0 0.0
  %73 = vmatpush1.msra.mxu0 0.0
  %74 = vmatprep.subr.mxu0 0.0
  %75 = vmatpush1.msra.mxu0 0.0
  %76 = vmatprep.subr.mxu0 0.0
  %77 = vmatpush1.msra.mxu0 0.0
  %78 = vmatprep.subr.mxu0 0.0
  %79 = vmatpush1.msra.mxu0 0.0
  %80 = vmatprep.subr.mxu0 0.0
  %81 = vmatpush1.msra.mxu0 0.0
  %82 = vmatprep.subr.mxu0 0.0
  %83 = vmatpush1.msra.mxu0 0.0
  %84 = vmatprep.subr.mxu0 0.0
  %85 = vmatpush1.msra.mxu0 0.0
  %86 = vmatprep.subr.mxu0 0.0
  %87 = vmatpush1.msra.mxu0 0.0
  %88 = vmatprep.subr.mxu0 0.0
  %89 = vmatpush1.msra.mxu0 0.0
  %90 = vmatprep.subr.mxu0 0.0
  %91 = vmatpush1.msra.mxu0 0.0
  %92 = vmatprep.subr.mxu0 0.0
  %93 = vmatpush1.msra.mxu0 0.0
  %94 = vmatprep.subr.mxu0 0.0
  %95 = vmatpush1.msra.mxu0 0.0
  %96 = vmatprep.subr.mxu0 0.0
  %97 = vmatpush1.msra.mxu0 0.0
  %98 = vmatprep.subr.mxu0 0.0
  %99 = vmatpush1.msra.mxu0 0.0
  %100 = vmatprep.subr.mxu0 0.0
  %101 = vmatpush1.msra.mxu0 0.0
  %102 = vmatprep.subr.mxu0 0.0
  %103 = vmatpush1.msra.mxu0 0.0
  %104 = vmatprep.subr.mxu0 0.0
  %105 = vmatpush1.msra.mxu0 0.0
  %106 = vmatprep.subr.mxu0 0.0
  %107 = vmatpush1.msra.mxu0 0.0
  %108 = vmatprep.subr.mxu0 0.0
  %109 = vmatpush1.msra.mxu0 0.0
  %110 = vmatprep.subr.mxu0 0.0
  %111 = vmatpush1.msra.mxu0 0.0
  %112 = vmatprep.subr.mxu0 0.0
  %113 = vmatpush1.msra.mxu0 0.0
  %114 = vmatprep.subr.mxu0 0.0
  %115 = vmatpush1.msra.mxu0 0.0
  %116 = vmatprep.subr.mxu0 0.0
  %117 = vmatpush1.msra.mxu0 0.0
  %118 = vmatprep.mubr.f32.mxu0 0.0
  %119 = vmatmul.mubr.f32.gmra.mrb[0].mxu0 %v52
  %v120 = vpop.f32.mrb[0].mxu0
  %v121 = vadd.f32 0.0, %v120
  %v122 = vpop.f32.mrb[0].mxu0
  %v123 = vadd.f32 0.0, %v122
  %124 = vdwg.mxu0
  %125 = vmatprep.subr.mxu0 %v45
  %126 = vmatpush1.msra.mxu0 %v44
  %127 = vmatprep.subr.mxu0 %v49
  %128 = vmatpush1.msra.mxu0 %v48
  %129 = vmatprep.subr.mxu0 0.0
  %130 = vmatpush1.msra.mxu0 0.0
  %131 = vmatprep.subr.mxu0 0.0
  %132 = vmatpush1.msra.mxu0 0.0
  %133 = vmatprep.subr.mxu0 0.0
  %134 = vmatpush1.msra.mxu0 0.0
  %135 = vmatprep.subr.mxu0 0.0
  %136 = vmatpush1.msra.mxu0 0.0
  %137 = vmatprep.subr.mxu0 0.0
  %138 = vmatpush1.msra.mxu0 0.0
  %139 = vmatprep.subr.mxu0 0.0
  %140 = vmatpush1.msra.mxu0 0.0
  %141 = vmatprep.subr.mxu0 0.0
  %142 = vmatpush1.msra.mxu0 0.0
  %143 = vmatprep.subr.mxu0 0.0
  %144 = vmatpush1.msra.mxu0 0.0
  %145 = vmatprep.subr.mxu0 0.0
  %146 = vmatpush1.msra.mxu0 0.0
  %147 = vmatprep.subr.mxu0 0.0
  %148 = vmatpush1.msra.mxu0 0.0
  %149 = vmatprep.subr.mxu0 0.0
  %150 = vmatpush1.msra.mxu0 0.0
  %151 = vmatprep.subr.mxu0 0.0
  %152 = vmatpush1.msra.mxu0 0.0
  %153 = vmatprep.subr.mxu0 0.0
  %154 = vmatpush1.msra.mxu0 0.0
  %155 = vmatprep.subr.mxu0 0.0
  %156 = vmatpush1.msra.mxu0 0.0
  %157 = vmatprep.subr.mxu0 0.0
  %158 = vmatpush1.msra.mxu0 0.0
  %159 = vmatprep.subr.mxu0 0.0
  %160 = vmatpush1.msra.mxu0 0.0
  %161 = vmatprep.subr.mxu0 0.0
  %162 = vmatpush1.msra.mxu0 0.0
  %163 = vmatprep.subr.mxu0 0.0
  %164 = vmatpush1.msra.mxu0 0.0
  %165 = vmatprep.subr.mxu0 0.0
  %166 = vmatpush1.msra.mxu0 0.0
  %167 = vmatprep.subr.mxu0 0.0
  %168 = vmatpush1.msra.mxu0 0.0
  %169 = vmatprep.subr.mxu0 0.0
  %170 = vmatpush1.msra.mxu0 0.0
  %171 = vmatprep.subr.mxu0 0.0
  %172 = vmatpush1.msra.mxu0 0.0
  %173 = vmatprep.subr.mxu0 0.0
  %174 = vmatpush1.msra.mxu0 0.0
  %175 = vmatprep.subr.mxu0 0.0
  %176 = vmatpush1.msra.mxu0 0.0
  %177 = vmatprep.subr.mxu0 0.0
  %178 = vmatpush1.msra.mxu0 0.0
  %179 = vmatprep.subr.mxu0 0.0
  %180 = vmatpush1.msra.mxu0 0.0
  %181 = vmatprep.subr.mxu0 0.0
  %182 = vmatpush1.msra.mxu0 0.0
  %183 = vmatprep.subr.mxu0 0.0
  %184 = vmatpush1.msra.mxu0 0.0
  %185 = vmatprep.subr.mxu0 0.0
  %186 = vmatpush1.msra.mxu0 0.0
  %187 = vmatprep.subr.mxu0 0.0
  %188 = vmatpush1.msra.mxu0 0.0
  %189 = vmatprep.mubr.f32.mxu0 0.0
  %190 = vmatmul.mubr.f32.gmra.mrb[0].mxu0 %v52
  %v191 = vpop.f32.mrb[0].mxu0
  %v192 = vadd.f32 0.0, %v191
  %v193 = vpop.f32.mrb[0].mxu0
  %v194 = vadd.f32 0.0, %v193
  %195 = vdwg.mxu0
  %vm196 = vcmask 1043456
  %v197 = vsel %vm196, %v121, 0.0
  %v198 = vsel %vm196, %v123, 0.0
  %v199 = vadd.f32 %v197, %v198
  %v200 = vsel %vm196, %v192, 0.0
  %v201 = vadd.f32 %v199, %v200
  %v202 = vsel %vm196, %v194, 0.0
  %v203 = vadd.f32 %v201, %v202
  %204 = vadd.xlane.f32.xlu0 %v203
  %v205 = vpop.xlane.xlu0 %204
  %v206 = vmul.f32 %v205, 0.001953125
  %v207 = vsub.f32 %v121, %v206
  %v208 = vsub.f32 %v123, %v206
  %v209 = vsub.f32 %v192, %v206
  %v210 = vsub.f32 %v194, %v206
  %v211 = vmul.f32 %v207, %v207
  %v212 = vmul.f32 %v208, %v208
  %v213 = vmul.f32 %v209, %v209
  %v214 = vmul.f32 %v210, %v210
  %v215 = vsel %vm196, %v211, 0.0
  %v216 = vsel %vm196, %v212, 0.0
  %v217 = vadd.f32 %v215, %v216
  %v218 = vsel %vm196, %v213, 0.0
  %v219 = vadd.f32 %v217, %v218
  %v220 = vsel %vm196, %v214, 0.0
  %v221 = vadd.f32 %v219, %v220
  %222 = vadd.xlane.f32.xlu0 %v221
  %v223 = vpop.xlane.xlu0 %222
  %v224 = vmul.f32 %v223, 0.001953125
  %v225 = vld [vmem:[%s4] sm:$0xf]
  %v226 = vadd.f32 %v224, 1e-05
  %v227 = vrsqrt.pop %v226
  %v228 = vmul.f32 %v225, %v227
  %230 = vset.pattern.permute.xlu0 0
  %231 = vperm.xlu0 %230, %v228
  %v232 = vpop.permute.xlu0 %231
  %v234 = vmul.f32 %v207, %v232
  %v235 = vmul.f32 %v208, %v232
  %v236 = vmul.f32 %v209, %v232
  %v237 = vmul.f32 %v210, %v232
  %v238 = vld [vmem:[%s5] sm:$0xf]
  %240 = vset.pattern.permute.xlu0 0
  %241 = vperm.xlu0 %240, %v238
  %v242 = vpop.permute.xlu0 %241
  %v244 = vadd.f32 %v234, %v242
  %v245 = vadd.f32 %v235, %v242
  %v246 = vadd.f32 %v236, %v242
  %v247 = vadd.f32 %v237, %v242
  %v248 = vmax.f32 %v244, 0.0
  %v249 = vmax.f32 %v245, 0.0
  %v250 = vmax.f32 %v246, 0.0
  %v251 = vmax.f32 %v247, 0.0
  %v252 = vld [vmem:[%s1] sm:$0xf]
  %v253 = vld [vmem:[%s2] sm:$0xf]
  %254 = vrot.lane.b32.xlu0 %v248, 127
  %v255 = vpop.permute.xlu0 %254
  %256 = vrot.lane.b32.xlu0 %v249, 127
  %v257 = vpop.permute.xlu0 %256
  %258 = vrot.lane.b32.xlu0 %v250, 127
  %v259 = vpop.permute.xlu0 %258
  %260 = vrot.lane.b32.xlu0 %v251, 127
  %v261 = vpop.permute.xlu0 %260
  %v262 = vlaneseq
  %v263 = vand.u32 %v262, 127
  %vm264 = vcmp.lt.s32.totalorder %v263, 127
  %v265 = vsel %vm264, %v259, %v261
  %v266 = vsel %vm264, %v257, %v259
  %v267 = vsel %vm264, %v255, %v257
  %v268 = vsel %vm264, %v261, %v255
  %vm269 = vcmp.lt.s32.totalorder %v253, 15
  %v270 = vsel %vm269, 1, 0
  %v271 = vcvt.s32.f32 %v270
  %v273 = vlaneseq
  %v274 = vshrl.u32 %v273, 7
  %v275 = vsub.s32 0, %v274
  %v276 = vrot.slane %v271, %v275
  %v277 = vlaneseq
  %v278 = vshrl.u32 %v277, 7
  %v279 = vsub.s32 1, %v278
  %v280 = vrot.slane %v271, %v279
  %v281 = vlaneseq
  %v282 = vshrl.u32 %v281, 7
  %v283 = vsub.s32 2, %v282
  %v284 = vrot.slane %v271, %v283
  %v285 = vlaneseq
  %v286 = vshrl.u32 %v285, 7
  %v287 = vsub.s32 3, %v286
  %v288 = vrot.slane %v271, %v287
  %v293 = vmul.f32 %v267, %v276
  %v294 = vmul.f32 %v266, %v280
  %v295 = vmul.f32 %v265, %v284
  %v296 = vmul.f32 %v268, %v288
  %297 = vrot.lane.b32.xlu0 %v248, 112
  %v298 = vpop.permute.xlu0 %297
  %299 = vrot.lane.b32.xlu0 %v249, 112
  %v300 = vpop.permute.xlu0 %299
  %301 = vrot.lane.b32.xlu0 %v250, 112
  %v302 = vpop.permute.xlu0 %301
  %303 = vrot.lane.b32.xlu0 %v251, 112
  %v304 = vpop.permute.xlu0 %303
  %vm305 = vcmp.lt.s32.totalorder %v263, 112
  %v306 = vsel %vm305, %v302, %v304
  %v307 = vsel %vm305, %v300, %v302
  %v308 = vsel %vm305, %v298, %v300
  %v309 = vsel %vm305, %v304, %v298
  %vm310 = vcmp.lt.s32.totalorder %v252, 15
  %v311 = vsel %vm310, 1, 0
  %v312 = vcvt.s32.f32 %v311
  %v314 = vlaneseq
  %v315 = vshrl.u32 %v314, 7
  %v316 = vsub.s32 0, %v315
  %v317 = vrot.slane %v312, %v316
  %v318 = vlaneseq
  %v319 = vshrl.u32 %v318, 7
  %v320 = vsub.s32 1, %v319
  %v321 = vrot.slane %v312, %v320
  %v322 = vlaneseq
  %v323 = vshrl.u32 %v322, 7
  %v324 = vsub.s32 2, %v323
  %v325 = vrot.slane %v312, %v324
  %v326 = vlaneseq
  %v327 = vshrl.u32 %v326, 7
  %v328 = vsub.s32 3, %v327
  %v329 = vrot.slane %v312, %v328
  %v334 = vmul.f32 %v308, %v317
  %v335 = vmul.f32 %v307, %v321
  %v336 = vmul.f32 %v306, %v325
  %v337 = vmul.f32 %v309, %v329
  %338 = vrot.lane.b32.xlu0 %v248, 111
  %v339 = vpop.permute.xlu0 %338
  %340 = vrot.lane.b32.xlu0 %v249, 111
  %v341 = vpop.permute.xlu0 %340
  %342 = vrot.lane.b32.xlu0 %v250, 111
  %v343 = vpop.permute.xlu0 %342
  %344 = vrot.lane.b32.xlu0 %v251, 111
  %v345 = vpop.permute.xlu0 %344
  %vm346 = vcmp.lt.s32.totalorder %v263, 111
  %v347 = vsel %vm346, %v343, %v345
  %v348 = vsel %vm346, %v341, %v343
  %v349 = vsel %vm346, %v339, %v341
  %v350 = vsel %vm346, %v345, %v339
  %vm351 = vmand %vm310, %vm269
  %v352 = vsel %vm351, 1, 0
  %v353 = vcvt.s32.f32 %v352
  %v355 = vlaneseq
  %v356 = vshrl.u32 %v355, 7
  %v357 = vsub.s32 0, %v356
  %v358 = vrot.slane %v353, %v357
  %v359 = vlaneseq
  %v360 = vshrl.u32 %v359, 7
  %v361 = vsub.s32 1, %v360
  %v362 = vrot.slane %v353, %v361
  %v363 = vlaneseq
  %v364 = vshrl.u32 %v363, 7
  %v365 = vsub.s32 2, %v364
  %v366 = vrot.slane %v353, %v365
  %v367 = vlaneseq
  %v368 = vshrl.u32 %v367, 7
  %v369 = vsub.s32 3, %v368
  %v370 = vrot.slane %v353, %v369
  %v375 = vmul.f32 %v349, %v358
  %v376 = vmul.f32 %v348, %v362
  %v377 = vmul.f32 %v347, %v366
  %v378 = vmul.f32 %v350, %v370
  %v383 = vrot.slane %v293, 4
  %v384 = vrot.slane %v294, 4
  %v385 = vrot.slane %v295, 4
  %v386 = vrot.slane %v296, 4
  %v395 = vrot.slane %v375, 4
  %v396 = vrot.slane %v376, 4
  %v397 = vrot.slane %v377, 4
  %v398 = vrot.slane %v378, 4
  %v403 = vsel %vm196, %v248, %v383
  %v404 = vsel %vm196, %v249, %v384
  %v405 = vsel %vm196, %v250, %v385
  %v406 = vsel %vm196, %v251, %v386
  %v407 = vsel %vm196, %v334, %v395
  %v408 = vsel %vm196, %v335, %v396
  %v409 = vsel %vm196, %v336, %v397
  %v410 = vsel %vm196, %v337, %v398
  %v411 = vld [vmem:[%s6] sm:$0xf]
  %v413 = vsel %vm50, %v411, 0
  %415 = vmatprep.subr.mxu0 %v404
  %416 = vmatpush1.msra.mxu0 %v403
  %417 = vmatprep.subr.mxu0 %v408
  %418 = vmatpush1.msra.mxu0 %v407
  %419 = vmatprep.subr.mxu0 0.0
  %420 = vmatpush1.msra.mxu0 0.0
  %421 = vmatprep.subr.mxu0 0.0
  %422 = vmatpush1.msra.mxu0 0.0
  %423 = vmatprep.subr.mxu0 0.0
  %424 = vmatpush1.msra.mxu0 0.0
  %425 = vmatprep.subr.mxu0 0.0
  %426 = vmatpush1.msra.mxu0 0.0
  %427 = vmatprep.subr.mxu0 0.0
  %428 = vmatpush1.msra.mxu0 0.0
  %429 = vmatprep.subr.mxu0 0.0
  %430 = vmatpush1.msra.mxu0 0.0
  %431 = vmatprep.subr.mxu0 0.0
  %432 = vmatpush1.msra.mxu0 0.0
  %433 = vmatprep.subr.mxu0 0.0
  %434 = vmatpush1.msra.mxu0 0.0
  %435 = vmatprep.subr.mxu0 0.0
  %436 = vmatpush1.msra.mxu0 0.0
  %437 = vmatprep.subr.mxu0 0.0
  %438 = vmatpush1.msra.mxu0 0.0
  %439 = vmatprep.subr.mxu0 0.0
  %440 = vmatpush1.msra.mxu0 0.0
  %441 = vmatprep.subr.mxu0 0.0
  %442 = vmatpush1.msra.mxu0 0.0
  %443 = vmatprep.subr.mxu0 0.0
  %444 = vmatpush1.msra.mxu0 0.0
  %445 = vmatprep.subr.mxu0 0.0
  %446 = vmatpush1.msra.mxu0 0.0
  %447 = vmatprep.subr.mxu0 0.0
  %448 = vmatpush1.msra.mxu0 0.0
  %449 = vmatprep.subr.mxu0 0.0
  %450 = vmatpush1.msra.mxu0 0.0
  %451 = vmatprep.subr.mxu0 0.0
  %452 = vmatpush1.msra.mxu0 0.0
  %453 = vmatprep.subr.mxu0 0.0
  %454 = vmatpush1.msra.mxu0 0.0
  %455 = vmatprep.subr.mxu0 0.0
  %456 = vmatpush1.msra.mxu0 0.0
  %457 = vmatprep.subr.mxu0 0.0
  %458 = vmatpush1.msra.mxu0 0.0
  %459 = vmatprep.subr.mxu0 0.0
  %460 = vmatpush1.msra.mxu0 0.0
  %461 = vmatprep.subr.mxu0 0.0
  %462 = vmatpush1.msra.mxu0 0.0
  %463 = vmatprep.subr.mxu0 0.0
  %464 = vmatpush1.msra.mxu0 0.0
  %465 = vmatprep.subr.mxu0 0.0
  %466 = vmatpush1.msra.mxu0 0.0
  %467 = vmatprep.subr.mxu0 0.0
  %468 = vmatpush1.msra.mxu0 0.0
  %469 = vmatprep.subr.mxu0 0.0
  %470 = vmatpush1.msra.mxu0 0.0
  %471 = vmatprep.subr.mxu0 0.0
  %472 = vmatpush1.msra.mxu0 0.0
  %473 = vmatprep.subr.mxu0 0.0
  %474 = vmatpush1.msra.mxu0 0.0
  %475 = vmatprep.subr.mxu0 0.0
  %476 = vmatpush1.msra.mxu0 0.0
  %477 = vmatprep.subr.mxu0 0.0
  %478 = vmatpush1.msra.mxu0 0.0
  %479 = vmatprep.mubr.f32.mxu0 0.0
  %480 = vmatmul.mubr.f32.gmra.mrb[0].mxu0 %v413
  %v481 = vpop.f32.mrb[0].mxu0
  %v482 = vadd.f32 0.0, %v481
  %v483 = vpop.f32.mrb[0].mxu0
  %v484 = vadd.f32 0.0, %v483
  %485 = vdwg.mxu0
  %486 = vmatprep.subr.mxu0 %v406
  %487 = vmatpush1.msra.mxu0 %v405
  %488 = vmatprep.subr.mxu0 %v410
  %489 = vmatpush1.msra.mxu0 %v409
  %490 = vmatprep.subr.mxu0 0.0
  %491 = vmatpush1.msra.mxu0 0.0
  %492 = vmatprep.subr.mxu0 0.0
  %493 = vmatpush1.msra.mxu0 0.0
  %494 = vmatprep.subr.mxu0 0.0
  %495 = vmatpush1.msra.mxu0 0.0
  %496 = vmatprep.subr.mxu0 0.0
  %497 = vmatpush1.msra.mxu0 0.0
  %498 = vmatprep.subr.mxu0 0.0
  %499 = vmatpush1.msra.mxu0 0.0
  %500 = vmatprep.subr.mxu0 0.0
  %501 = vmatpush1.msra.mxu0 0.0
  %502 = vmatprep.subr.mxu0 0.0
  %503 = vmatpush1.msra.mxu0 0.0
  %504 = vmatprep.subr.mxu0 0.0
  %505 = vmatpush1.msra.mxu0 0.0
  %506 = vmatprep.subr.mxu0 0.0
  %507 = vmatpush1.msra.mxu0 0.0
  %508 = vmatprep.subr.mxu0 0.0
  %509 = vmatpush1.msra.mxu0 0.0
  %510 = vmatprep.subr.mxu0 0.0
  %511 = vmatpush1.msra.mxu0 0.0
  %512 = vmatprep.subr.mxu0 0.0
  %513 = vmatpush1.msra.mxu0 0.0
  %514 = vmatprep.subr.mxu0 0.0
  %515 = vmatpush1.msra.mxu0 0.0
  %516 = vmatprep.subr.mxu0 0.0
  %517 = vmatpush1.msra.mxu0 0.0
  %518 = vmatprep.subr.mxu0 0.0
  %519 = vmatpush1.msra.mxu0 0.0
  %520 = vmatprep.subr.mxu0 0.0
  %521 = vmatpush1.msra.mxu0 0.0
  %522 = vmatprep.subr.mxu0 0.0
  %523 = vmatpush1.msra.mxu0 0.0
  %524 = vmatprep.subr.mxu0 0.0
  %525 = vmatpush1.msra.mxu0 0.0
  %526 = vmatprep.subr.mxu0 0.0
  %527 = vmatpush1.msra.mxu0 0.0
  %528 = vmatprep.subr.mxu0 0.0
  %529 = vmatpush1.msra.mxu0 0.0
  %530 = vmatprep.subr.mxu0 0.0
  %531 = vmatpush1.msra.mxu0 0.0
  %532 = vmatprep.subr.mxu0 0.0
  %533 = vmatpush1.msra.mxu0 0.0
  %534 = vmatprep.subr.mxu0 0.0
  %535 = vmatpush1.msra.mxu0 0.0
  %536 = vmatprep.subr.mxu0 0.0
  %537 = vmatpush1.msra.mxu0 0.0
  %538 = vmatprep.subr.mxu0 0.0
  %539 = vmatpush1.msra.mxu0 0.0
  %540 = vmatprep.subr.mxu0 0.0
  %541 = vmatpush1.msra.mxu0 0.0
  %542 = vmatprep.subr.mxu0 0.0
  %543 = vmatpush1.msra.mxu0 0.0
  %544 = vmatprep.subr.mxu0 0.0
  %545 = vmatpush1.msra.mxu0 0.0
  %546 = vmatprep.subr.mxu0 0.0
  %547 = vmatpush1.msra.mxu0 0.0
  %548 = vmatprep.subr.mxu0 0.0
  %549 = vmatpush1.msra.mxu0 0.0
  %550 = vmatprep.mubr.f32.mxu0 0.0
  %551 = vmatmul.mubr.f32.gmra.mrb[0].mxu0 %v413
  %v552 = vpop.f32.mrb[0].mxu0
  %v553 = vadd.f32 0.0, %v552
  %v554 = vpop.f32.mrb[0].mxu0
  %v555 = vadd.f32 0.0, %v554
  %556 = vdwg.mxu0
  %s557 = scalar_lea.vmem %s6, 4
  %v558 = vld [vmem:[%s557] sm:$0xf]
  %v560 = vsel %vm50, %v558, 0
  %562 = vmatprep.subr.mxu0 %v404
  %563 = vmatpush1.msra.mxu0 %v403
  %564 = vmatprep.subr.mxu0 %v408
  %565 = vmatpush1.msra.mxu0 %v407
  %566 = vmatprep.subr.mxu0 0.0
  %567 = vmatpush1.msra.mxu0 0.0
  %568 = vmatprep.subr.mxu0 0.0
  %569 = vmatpush1.msra.mxu0 0.0
  %570 = vmatprep.subr.mxu0 0.0
  %571 = vmatpush1.msra.mxu0 0.0
  %572 = vmatprep.subr.mxu0 0.0
  %573 = vmatpush1.msra.mxu0 0.0
  %574 = vmatprep.subr.mxu0 0.0
  %575 = vmatpush1.msra.mxu0 0.0
  %576 = vmatprep.subr.mxu0 0.0
  %577 = vmatpush1.msra.mxu0 0.0
  %578 = vmatprep.subr.mxu0 0.0
  %579 = vmatpush1.msra.mxu0 0.0
  %580 = vmatprep.subr.mxu0 0.0
  %581 = vmatpush1.msra.mxu0 0.0
  %582 = vmatprep.subr.mxu0 0.0
  %583 = vmatpush1.msra.mxu0 0.0
  %584 = vmatprep.subr.mxu0 0.0
  %585 = vmatpush1.msra.mxu0 0.0
  %586 = vmatprep.subr.mxu0 0.0
  %587 = vmatpush1.msra.mxu0 0.0
  %588 = vmatprep.subr.mxu0 0.0
  %589 = vmatpush1.msra.mxu0 0.0
  %590 = vmatprep.subr.mxu0 0.0
  %591 = vmatpush1.msra.mxu0 0.0
  %592 = vmatprep.subr.mxu0 0.0
  %593 = vmatpush1.msra.mxu0 0.0
  %594 = vmatprep.subr.mxu0 0.0
  %595 = vmatpush1.msra.mxu0 0.0
  %596 = vmatprep.subr.mxu0 0.0
  %597 = vmatpush1.msra.mxu0 0.0
  %598 = vmatprep.subr.mxu0 0.0
  %599 = vmatpush1.msra.mxu0 0.0
  %600 = vmatprep.subr.mxu0 0.0
  %601 = vmatpush1.msra.mxu0 0.0
  %602 = vmatprep.subr.mxu0 0.0
  %603 = vmatpush1.msra.mxu0 0.0
  %604 = vmatprep.subr.mxu0 0.0
  %605 = vmatpush1.msra.mxu0 0.0
  %606 = vmatprep.subr.mxu0 0.0
  %607 = vmatpush1.msra.mxu0 0.0
  %608 = vmatprep.subr.mxu0 0.0
  %609 = vmatpush1.msra.mxu0 0.0
  %610 = vmatprep.subr.mxu0 0.0
  %611 = vmatpush1.msra.mxu0 0.0
  %612 = vmatprep.subr.mxu0 0.0
  %613 = vmatpush1.msra.mxu0 0.0
  %614 = vmatprep.subr.mxu0 0.0
  %615 = vmatpush1.msra.mxu0 0.0
  %616 = vmatprep.subr.mxu0 0.0
  %617 = vmatpush1.msra.mxu0 0.0
  %618 = vmatprep.subr.mxu0 0.0
  %619 = vmatpush1.msra.mxu0 0.0
  %620 = vmatprep.subr.mxu0 0.0
  %621 = vmatpush1.msra.mxu0 0.0
  %622 = vmatprep.subr.mxu0 0.0
  %623 = vmatpush1.msra.mxu0 0.0
  %624 = vmatprep.subr.mxu0 0.0
  %625 = vmatpush1.msra.mxu0 0.0
  %626 = vmatprep.mubr.f32.mxu0 0.0
  %627 = vmatmul.mubr.f32.gmra.mrb[0].mxu0 %v560
  %v628 = vpop.f32.mrb[0].mxu0
  %v629 = vadd.f32 0.0, %v628
  %v630 = vpop.f32.mrb[0].mxu0
  %v631 = vadd.f32 0.0, %v630
  %632 = vdwg.mxu0
  %633 = vmatprep.subr.mxu0 %v406
  %634 = vmatpush1.msra.mxu0 %v405
  %635 = vmatprep.subr.mxu0 %v410
  %636 = vmatpush1.msra.mxu0 %v409
  %637 = vmatprep.subr.mxu0 0.0
  %638 = vmatpush1.msra.mxu0 0.0
  %639 = vmatprep.subr.mxu0 0.0
  %640 = vmatpush1.msra.mxu0 0.0
  %641 = vmatprep.subr.mxu0 0.0
  %642 = vmatpush1.msra.mxu0 0.0
  %643 = vmatprep.subr.mxu0 0.0
  %644 = vmatpush1.msra.mxu0 0.0
  %645 = vmatprep.subr.mxu0 0.0
  %646 = vmatpush1.msra.mxu0 0.0
  %647 = vmatprep.subr.mxu0 0.0
  %648 = vmatpush1.msra.mxu0 0.0
  %649 = vmatprep.subr.mxu0 0.0
  %650 = vmatpush1.msra.mxu0 0.0
  %651 = vmatprep.subr.mxu0 0.0
  %652 = vmatpush1.msra.mxu0 0.0
  %653 = vmatprep.subr.mxu0 0.0
  %654 = vmatpush1.msra.mxu0 0.0
  %655 = vmatprep.subr.mxu0 0.0
  %656 = vmatpush1.msra.mxu0 0.0
  %657 = vmatprep.subr.mxu0 0.0
  %658 = vmatpush1.msra.mxu0 0.0
  %659 = vmatprep.subr.mxu0 0.0
  %660 = vmatpush1.msra.mxu0 0.0
  %661 = vmatprep.subr.mxu0 0.0
  %662 = vmatpush1.msra.mxu0 0.0
  %663 = vmatprep.subr.mxu0 0.0
  %664 = vmatpush1.msra.mxu0 0.0
  %665 = vmatprep.subr.mxu0 0.0
  %666 = vmatpush1.msra.mxu0 0.0
  %667 = vmatprep.subr.mxu0 0.0
  %668 = vmatpush1.msra.mxu0 0.0
  %669 = vmatprep.subr.mxu0 0.0
  %670 = vmatpush1.msra.mxu0 0.0
  %671 = vmatprep.subr.mxu0 0.0
  %672 = vmatpush1.msra.mxu0 0.0
  %673 = vmatprep.subr.mxu0 0.0
  %674 = vmatpush1.msra.mxu0 0.0
  %675 = vmatprep.subr.mxu0 0.0
  %676 = vmatpush1.msra.mxu0 0.0
  %677 = vmatprep.subr.mxu0 0.0
  %678 = vmatpush1.msra.mxu0 0.0
  %679 = vmatprep.subr.mxu0 0.0
  %680 = vmatpush1.msra.mxu0 0.0
  %681 = vmatprep.subr.mxu0 0.0
  %682 = vmatpush1.msra.mxu0 0.0
  %683 = vmatprep.subr.mxu0 0.0
  %684 = vmatpush1.msra.mxu0 0.0
  %685 = vmatprep.subr.mxu0 0.0
  %686 = vmatpush1.msra.mxu0 0.0
  %687 = vmatprep.subr.mxu0 0.0
  %688 = vmatpush1.msra.mxu0 0.0
  %689 = vmatprep.subr.mxu0 0.0
  %690 = vmatpush1.msra.mxu0 0.0
  %691 = vmatprep.subr.mxu0 0.0
  %692 = vmatpush1.msra.mxu0 0.0
  %693 = vmatprep.subr.mxu0 0.0
  %694 = vmatpush1.msra.mxu0 0.0
  %695 = vmatprep.subr.mxu0 0.0
  %696 = vmatpush1.msra.mxu0 0.0
  %697 = vmatprep.mubr.f32.mxu0 0.0
  %698 = vmatmul.mubr.f32.gmra.mrb[0].mxu0 %v560
  %v699 = vpop.f32.mrb[0].mxu0
  %v700 = vadd.f32 0.0, %v699
  %v701 = vpop.f32.mrb[0].mxu0
  %v702 = vadd.f32 0.0, %v701
  %703 = vdwg.mxu0
  %s704 = scalar_lea.vmem %s6, 8
  %v705 = vld [vmem:[%s704] sm:$0xf]
  %v707 = vsel %vm50, %v705, 0
  %709 = vmatprep.subr.mxu0 %v404
  %710 = vmatpush1.msra.mxu0 %v403
  %711 = vmatprep.subr.mxu0 %v408
  %712 = vmatpush1.msra.mxu0 %v407
  %713 = vmatprep.subr.mxu0 0.0
  %714 = vmatpush1.msra.mxu0 0.0
  %715 = vmatprep.subr.mxu0 0.0
  %716 = vmatpush1.msra.mxu0 0.0
  %717 = vmatprep.subr.mxu0 0.0
  %718 = vmatpush1.msra.mxu0 0.0
  %719 = vmatprep.subr.mxu0 0.0
  %720 = vmatpush1.msra.mxu0 0.0
  %721 = vmatprep.subr.mxu0 0.0
  %722 = vmatpush1.msra.mxu0 0.0
  %723 = vmatprep.subr.mxu0 0.0
  %724 = vmatpush1.msra.mxu0 0.0
  %725 = vmatprep.subr.mxu0 0.0
  %726 = vmatpush1.msra.mxu0 0.0
  %727 = vmatprep.subr.mxu0 0.0
  %728 = vmatpush1.msra.mxu0 0.0
  %729 = vmatprep.subr.mxu0 0.0
  %730 = vmatpush1.msra.mxu0 0.0
  %731 = vmatprep.subr.mxu0 0.0
  %732 = vmatpush1.msra.mxu0 0.0
  %733 = vmatprep.subr.mxu0 0.0
  %734 = vmatpush1.msra.mxu0 0.0
  %735 = vmatprep.subr.mxu0 0.0
  %736 = vmatpush1.msra.mxu0 0.0
  %737 = vmatprep.subr.mxu0 0.0
  %738 = vmatpush1.msra.mxu0 0.0
  %739 = vmatprep.subr.mxu0 0.0
  %740 = vmatpush1.msra.mxu0 0.0
  %741 = vmatprep.subr.mxu0 0.0
  %742 = vmatpush1.msra.mxu0 0.0
  %743 = vmatprep.subr.mxu0 0.0
  %744 = vmatpush1.msra.mxu0 0.0
  %745 = vmatprep.subr.mxu0 0.0
  %746 = vmatpush1.msra.mxu0 0.0
  %747 = vmatprep.subr.mxu0 0.0
  %748 = vmatpush1.msra.mxu0 0.0
  %749 = vmatprep.subr.mxu0 0.0
  %750 = vmatpush1.msra.mxu0 0.0
  %751 = vmatprep.subr.mxu0 0.0
  %752 = vmatpush1.msra.mxu0 0.0
  %753 = vmatprep.subr.mxu0 0.0
  %754 = vmatpush1.msra.mxu0 0.0
  %755 = vmatprep.subr.mxu0 0.0
  %756 = vmatpush1.msra.mxu0 0.0
  %757 = vmatprep.subr.mxu0 0.0
  %758 = vmatpush1.msra.mxu0 0.0
  %759 = vmatprep.subr.mxu0 0.0
  %760 = vmatpush1.msra.mxu0 0.0
  %761 = vmatprep.subr.mxu0 0.0
  %762 = vmatpush1.msra.mxu0 0.0
  %763 = vmatprep.subr.mxu0 0.0
  %764 = vmatpush1.msra.mxu0 0.0
  %765 = vmatprep.subr.mxu0 0.0
  %766 = vmatpush1.msra.mxu0 0.0
  %767 = vmatprep.subr.mxu0 0.0
  %768 = vmatpush1.msra.mxu0 0.0
  %769 = vmatprep.subr.mxu0 0.0
  %770 = vmatpush1.msra.mxu0 0.0
  %771 = vmatprep.subr.mxu0 0.0
  %772 = vmatpush1.msra.mxu0 0.0
  %773 = vmatprep.mubr.f32.mxu0 0.0
  %774 = vmatmul.mubr.f32.gmra.mrb[0].mxu0 %v707
  %v775 = vpop.f32.mrb[0].mxu0
  %v776 = vadd.f32 0.0, %v775
  %v777 = vpop.f32.mrb[0].mxu0
  %v778 = vadd.f32 0.0, %v777
  %779 = vdwg.mxu0
  %780 = vmatprep.subr.mxu0 %v406
  %781 = vmatpush1.msra.mxu0 %v405
  %782 = vmatprep.subr.mxu0 %v410
  %783 = vmatpush1.msra.mxu0 %v409
  %784 = vmatprep.subr.mxu0 0.0
  %785 = vmatpush1.msra.mxu0 0.0
  %786 = vmatprep.subr.mxu0 0.0
  %787 = vmatpush1.msra.mxu0 0.0
  %788 = vmatprep.subr.mxu0 0.0
  %789 = vmatpush1.msra.mxu0 0.0
  %790 = vmatprep.subr.mxu0 0.0
  %791 = vmatpush1.msra.mxu0 0.0
  %792 = vmatprep.subr.mxu0 0.0
  %793 = vmatpush1.msra.mxu0 0.0
  %794 = vmatprep.subr.mxu0 0.0
  %795 = vmatpush1.msra.mxu0 0.0
  %796 = vmatprep.subr.mxu0 0.0
  %797 = vmatpush1.msra.mxu0 0.0
  %798 = vmatprep.subr.mxu0 0.0
  %799 = vmatpush1.msra.mxu0 0.0
  %800 = vmatprep.subr.mxu0 0.0
  %801 = vmatpush1.msra.mxu0 0.0
  %802 = vmatprep.subr.mxu0 0.0
  %803 = vmatpush1.msra.mxu0 0.0
  %804 = vmatprep.subr.mxu0 0.0
  %805 = vmatpush1.msra.mxu0 0.0
  %806 = vmatprep.subr.mxu0 0.0
  %807 = vmatpush1.msra.mxu0 0.0
  %808 = vmatprep.subr.mxu0 0.0
  %809 = vmatpush1.msra.mxu0 0.0
  %810 = vmatprep.subr.mxu0 0.0
  %811 = vmatpush1.msra.mxu0 0.0
  %812 = vmatprep.subr.mxu0 0.0
  %813 = vmatpush1.msra.mxu0 0.0
  %814 = vmatprep.subr.mxu0 0.0
  %815 = vmatpush1.msra.mxu0 0.0
  %816 = vmatprep.subr.mxu0 0.0
  %817 = vmatpush1.msra.mxu0 0.0
  %818 = vmatprep.subr.mxu0 0.0
  %819 = vmatpush1.msra.mxu0 0.0
  %820 = vmatprep.subr.mxu0 0.0
  %821 = vmatpush1.msra.mxu0 0.0
  %822 = vmatprep.subr.mxu0 0.0
  %823 = vmatpush1.msra.mxu0 0.0
  %824 = vmatprep.subr.mxu0 0.0
  %825 = vmatpush1.msra.mxu0 0.0
  %826 = vmatprep.subr.mxu0 0.0
  %827 = vmatpush1.msra.mxu0 0.0
  %828 = vmatprep.subr.mxu0 0.0
  %829 = vmatpush1.msra.mxu0 0.0
  %830 = vmatprep.subr.mxu0 0.0
  %831 = vmatpush1.msra.mxu0 0.0
  %832 = vmatprep.subr.mxu0 0.0
  %833 = vmatpush1.msra.mxu0 0.0
  %834 = vmatprep.subr.mxu0 0.0
  %835 = vmatpush1.msra.mxu0 0.0
  %836 = vmatprep.subr.mxu0 0.0
  %837 = vmatpush1.msra.mxu0 0.0
  %838 = vmatprep.subr.mxu0 0.0
  %839 = vmatpush1.msra.mxu0 0.0
  %840 = vmatprep.subr.mxu0 0.0
  %841 = vmatpush1.msra.mxu0 0.0
  %842 = vmatprep.subr.mxu0 0.0
  %843 = vmatpush1.msra.mxu0 0.0
  %844 = vmatprep.mubr.f32.mxu0 0.0
  %845 = vmatmul.mubr.f32.gmra.mrb[0].mxu0 %v707
  %v846 = vpop.f32.mrb[0].mxu0
  %v847 = vadd.f32 0.0, %v846
  %v848 = vpop.f32.mrb[0].mxu0
  %v849 = vadd.f32 0.0, %v848
  %850 = vdwg.mxu0
  %s851 = scalar_lea.vmem %s6, 12
  %v852 = vld [vmem:[%s851] sm:$0xf]
  %v854 = vsel %vm50, %v852, 0
  %856 = vmatprep.subr.mxu0 %v404
  %857 = vmatpush1.msra.mxu0 %v403
  %858 = vmatprep.subr.mxu0 %v408
  %859 = vmatpush1.msra.mxu0 %v407
  %860 = vmatprep.subr.mxu0 0.0
  %861 = vmatpush1.msra.mxu0 0.0
  %862 = vmatprep.subr.mxu0 0.0
  %863 = vmatpush1.msra.mxu0 0.0
  %864 = vmatprep.subr.mxu0 0.0
  %865 = vmatpush1.msra.mxu0 0.0
  %866 = vmatprep.subr.mxu0 0.0
  %867 = vmatpush1.msra.mxu0 0.0
  %868 = vmatprep.subr.mxu0 0.0
  %869 = vmatpush1.msra.mxu0 0.0
  %870 = vmatprep.subr.mxu0 0.0
  %871 = vmatpush1.msra.mxu0 0.0
  %872 = vmatprep.subr.mxu0 0.0
  %873 = vmatpush1.msra.mxu0 0.0
  %874 = vmatprep.subr.mxu0 0.0
  %875 = vmatpush1.msra.mxu0 0.0
  %876 = vmatprep.subr.mxu0 0.0
  %877 = vmatpush1.msra.mxu0 0.0
  %878 = vmatprep.subr.mxu0 0.0
  %879 = vmatpush1.msra.mxu0 0.0
  %880 = vmatprep.subr.mxu0 0.0
  %881 = vmatpush1.msra.mxu0 0.0
  %882 = vmatprep.subr.mxu0 0.0
  %883 = vmatpush1.msra.mxu0 0.0
  %884 = vmatprep.subr.mxu0 0.0
  %885 = vmatpush1.msra.mxu0 0.0
  %886 = vmatprep.subr.mxu0 0.0
  %887 = vmatpush1.msra.mxu0 0.0
  %888 = vmatprep.subr.mxu0 0.0
  %889 = vmatpush1.msra.mxu0 0.0
  %890 = vmatprep.subr.mxu0 0.0
  %891 = vmatpush1.msra.mxu0 0.0
  %892 = vmatprep.subr.mxu0 0.0
  %893 = vmatpush1.msra.mxu0 0.0
  %894 = vmatprep.subr.mxu0 0.0
  %895 = vmatpush1.msra.mxu0 0.0
  %896 = vmatprep.subr.mxu0 0.0
  %897 = vmatpush1.msra.mxu0 0.0
  %898 = vmatprep.subr.mxu0 0.0
  %899 = vmatpush1.msra.mxu0 0.0
  %900 = vmatprep.subr.mxu0 0.0
  %901 = vmatpush1.msra.mxu0 0.0
  %902 = vmatprep.subr.mxu0 0.0
  %903 = vmatpush1.msra.mxu0 0.0
  %904 = vmatprep.subr.mxu0 0.0
  %905 = vmatpush1.msra.mxu0 0.0
  %906 = vmatprep.subr.mxu0 0.0
  %907 = vmatpush1.msra.mxu0 0.0
  %908 = vmatprep.subr.mxu0 0.0
  %909 = vmatpush1.msra.mxu0 0.0
  %910 = vmatprep.subr.mxu0 0.0
  %911 = vmatpush1.msra.mxu0 0.0
  %912 = vmatprep.subr.mxu0 0.0
  %913 = vmatpush1.msra.mxu0 0.0
  %914 = vmatprep.subr.mxu0 0.0
  %915 = vmatpush1.msra.mxu0 0.0
  %916 = vmatprep.subr.mxu0 0.0
  %917 = vmatpush1.msra.mxu0 0.0
  %918 = vmatprep.subr.mxu0 0.0
  %919 = vmatpush1.msra.mxu0 0.0
  %920 = vmatprep.mubr.f32.mxu0 0.0
  %921 = vmatmul.mubr.f32.gmra.mrb[0].mxu0 %v854
  %v922 = vpop.f32.mrb[0].mxu0
  %v923 = vadd.f32 0.0, %v922
  %v924 = vpop.f32.mrb[0].mxu0
  %v925 = vadd.f32 0.0, %v924
  %926 = vdwg.mxu0
  %927 = vmatprep.subr.mxu0 %v406
  %928 = vmatpush1.msra.mxu0 %v405
  %929 = vmatprep.subr.mxu0 %v410
  %930 = vmatpush1.msra.mxu0 %v409
  %931 = vmatprep.subr.mxu0 0.0
  %932 = vmatpush1.msra.mxu0 0.0
  %933 = vmatprep.subr.mxu0 0.0
  %934 = vmatpush1.msra.mxu0 0.0
  %935 = vmatprep.subr.mxu0 0.0
  %936 = vmatpush1.msra.mxu0 0.0
  %937 = vmatprep.subr.mxu0 0.0
  %938 = vmatpush1.msra.mxu0 0.0
  %939 = vmatprep.subr.mxu0 0.0
  %940 = vmatpush1.msra.mxu0 0.0
  %941 = vmatprep.subr.mxu0 0.0
  %942 = vmatpush1.msra.mxu0 0.0
  %943 = vmatprep.subr.mxu0 0.0
  %944 = vmatpush1.msra.mxu0 0.0
  %945 = vmatprep.subr.mxu0 0.0
  %946 = vmatpush1.msra.mxu0 0.0
  %947 = vmatprep.subr.mxu0 0.0
  %948 = vmatpush1.msra.mxu0 0.0
  %949 = vmatprep.subr.mxu0 0.0
  %950 = vmatpush1.msra.mxu0 0.0
  %951 = vmatprep.subr.mxu0 0.0
  %952 = vmatpush1.msra.mxu0 0.0
  %953 = vmatprep.subr.mxu0 0.0
  %954 = vmatpush1.msra.mxu0 0.0
  %955 = vmatprep.subr.mxu0 0.0
  %956 = vmatpush1.msra.mxu0 0.0
  %957 = vmatprep.subr.mxu0 0.0
  %958 = vmatpush1.msra.mxu0 0.0
  %959 = vmatprep.subr.mxu0 0.0
  %960 = vmatpush1.msra.mxu0 0.0
  %961 = vmatprep.subr.mxu0 0.0
  %962 = vmatpush1.msra.mxu0 0.0
  %963 = vmatprep.subr.mxu0 0.0
  %964 = vmatpush1.msra.mxu0 0.0
  %965 = vmatprep.subr.mxu0 0.0
  %966 = vmatpush1.msra.mxu0 0.0
  %967 = vmatprep.subr.mxu0 0.0
  %968 = vmatpush1.msra.mxu0 0.0
  %969 = vmatprep.subr.mxu0 0.0
  %970 = vmatpush1.msra.mxu0 0.0
  %971 = vmatprep.subr.mxu0 0.0
  %972 = vmatpush1.msra.mxu0 0.0
  %973 = vmatprep.subr.mxu0 0.0
  %974 = vmatpush1.msra.mxu0 0.0
  %975 = vmatprep.subr.mxu0 0.0
  %976 = vmatpush1.msra.mxu0 0.0
  %977 = vmatprep.subr.mxu0 0.0
  %978 = vmatpush1.msra.mxu0 0.0
  %979 = vmatprep.subr.mxu0 0.0
  %980 = vmatpush1.msra.mxu0 0.0
  %981 = vmatprep.subr.mxu0 0.0
  %982 = vmatpush1.msra.mxu0 0.0
  %983 = vmatprep.subr.mxu0 0.0
  %984 = vmatpush1.msra.mxu0 0.0
  %985 = vmatprep.subr.mxu0 0.0
  %986 = vmatpush1.msra.mxu0 0.0
  %987 = vmatprep.subr.mxu0 0.0
  %988 = vmatpush1.msra.mxu0 0.0
  %989 = vmatprep.subr.mxu0 0.0
  %990 = vmatpush1.msra.mxu0 0.0
  %991 = vmatprep.mubr.f32.mxu0 0.0
  %992 = vmatmul.mubr.f32.gmra.mrb[0].mxu0 %v854
  %v993 = vpop.f32.mrb[0].mxu0
  %v994 = vadd.f32 0.0, %v993
  %v995 = vpop.f32.mrb[0].mxu0
  %v996 = vadd.f32 0.0, %v995
  %997 = vdwg.mxu0
  %v998 = vsel %vm196, %v482, 0.0
  %v999 = vsel %vm196, %v484, 0.0
  %v1000 = vadd.f32 %v998, %v999
  %v1001 = vsel %vm196, %v553, 0.0
  %v1002 = vadd.f32 %v1000, %v1001
  %v1003 = vsel %vm196, %v555, 0.0
  %v1004 = vadd.f32 %v1002, %v1003
  %v1005 = vsel %vm196, %v629, 0.0
  %v1006 = vadd.f32 %v1004, %v1005
  %v1007 = vsel %vm196, %v631, 0.0
  %v1008 = vadd.f32 %v1006, %v1007
  %v1009 = vsel %vm196, %v700, 0.0
  %v1010 = vadd.f32 %v1008, %v1009
  %v1011 = vsel %vm196, %v702, 0.0
  %v1012 = vadd.f32 %v1010, %v1011
  %v1013 = vsel %vm196, %v776, 0.0
  %v1014 = vadd.f32 %v1012, %v1013
  %v1015 = vsel %vm196, %v778, 0.0
  %v1016 = vadd.f32 %v1014, %v1015
  %v1017 = vsel %vm196, %v847, 0.0
  %v1018 = vadd.f32 %v1016, %v1017
  %v1019 = vsel %vm196, %v849, 0.0
  %v1020 = vadd.f32 %v1018, %v1019
  %v1021 = vsel %vm196, %v923, 0.0
  %v1022 = vadd.f32 %v1020, %v1021
  %v1023 = vsel %vm196, %v925, 0.0
  %v1024 = vadd.f32 %v1022, %v1023
  %v1025 = vsel %vm196, %v994, 0.0
  %v1026 = vadd.f32 %v1024, %v1025
  %v1027 = vsel %vm196, %v996, 0.0
  %v1028 = vadd.f32 %v1026, %v1027
  %1029 = vadd.xlane.f32.xlu0 %v1028
  %v1030 = vpop.xlane.xlu0 %1029
  %v1031 = vmul.f32 %v1030, 0.00048828125
  %v1032 = vsub.f32 %v482, %v1031
  %v1033 = vsub.f32 %v484, %v1031
  %v1034 = vsub.f32 %v553, %v1031
  %v1035 = vsub.f32 %v555, %v1031
  %v1036 = vsub.f32 %v629, %v1031
  %v1037 = vsub.f32 %v631, %v1031
  %v1038 = vsub.f32 %v700, %v1031
  %v1039 = vsub.f32 %v702, %v1031
  %v1040 = vsub.f32 %v776, %v1031
  %v1041 = vsub.f32 %v778, %v1031
  %v1042 = vsub.f32 %v847, %v1031
  %v1043 = vsub.f32 %v849, %v1031
  %v1044 = vsub.f32 %v923, %v1031
  %v1045 = vsub.f32 %v925, %v1031
  %v1046 = vsub.f32 %v994, %v1031
  %v1047 = vsub.f32 %v996, %v1031
  %v1048 = vmul.f32 %v1032, %v1032
  %v1049 = vmul.f32 %v1033, %v1033
  %v1050 = vmul.f32 %v1034, %v1034
  %v1051 = vmul.f32 %v1035, %v1035
  %v1052 = vmul.f32 %v1036, %v1036
  %v1053 = vmul.f32 %v1037, %v1037
  %v1054 = vmul.f32 %v1038, %v1038
  %v1055 = vmul.f32 %v1039, %v1039
  %v1056 = vmul.f32 %v1040, %v1040
  %v1057 = vmul.f32 %v1041, %v1041
  %v1058 = vmul.f32 %v1042, %v1042
  %v1059 = vmul.f32 %v1043, %v1043
  %v1060 = vmul.f32 %v1044, %v1044
  %v1061 = vmul.f32 %v1045, %v1045
  %v1062 = vmul.f32 %v1046, %v1046
  %v1063 = vmul.f32 %v1047, %v1047
  %v1064 = vsel %vm196, %v1048, 0.0
  %v1065 = vsel %vm196, %v1049, 0.0
  %v1066 = vadd.f32 %v1064, %v1065
  %v1067 = vsel %vm196, %v1050, 0.0
  %v1068 = vadd.f32 %v1066, %v1067
  %v1069 = vsel %vm196, %v1051, 0.0
  %v1070 = vadd.f32 %v1068, %v1069
  %v1071 = vsel %vm196, %v1052, 0.0
  %v1072 = vadd.f32 %v1070, %v1071
  %v1073 = vsel %vm196, %v1053, 0.0
  %v1074 = vadd.f32 %v1072, %v1073
  %v1075 = vsel %vm196, %v1054, 0.0
  %v1076 = vadd.f32 %v1074, %v1075
  %v1077 = vsel %vm196, %v1055, 0.0
  %v1078 = vadd.f32 %v1076, %v1077
  %v1079 = vsel %vm196, %v1056, 0.0
  %v1080 = vadd.f32 %v1078, %v1079
  %v1081 = vsel %vm196, %v1057, 0.0
  %v1082 = vadd.f32 %v1080, %v1081
  %v1083 = vsel %vm196, %v1058, 0.0
  %v1084 = vadd.f32 %v1082, %v1083
  %v1085 = vsel %vm196, %v1059, 0.0
  %v1086 = vadd.f32 %v1084, %v1085
  %v1087 = vsel %vm196, %v1060, 0.0
  %v1088 = vadd.f32 %v1086, %v1087
  %v1089 = vsel %vm196, %v1061, 0.0
  %v1090 = vadd.f32 %v1088, %v1089
  %v1091 = vsel %vm196, %v1062, 0.0
  %v1092 = vadd.f32 %v1090, %v1091
  %v1093 = vsel %vm196, %v1063, 0.0
  %v1094 = vadd.f32 %v1092, %v1093
  %1095 = vadd.xlane.f32.xlu0 %v1094
  %v1096 = vpop.xlane.xlu0 %1095
  %v1097 = vmul.f32 %v1096, 0.00048828125
  %v1098 = vld [vmem:[%s7] sm:$0xf]
  %v1099 = vadd.f32 %v1097, 1e-05
  %v1100 = vrsqrt.pop %v1099
  %v1101 = vmul.f32 %v1098, %v1100
  %1103 = vset.pattern.permute.xlu0 0
  %1104 = vperm.xlu0 %1103, %v1101
  %v1105 = vpop.permute.xlu0 %1104
  %v1107 = vmul.f32 %v1032, %v1105
  %v1108 = vmul.f32 %v1033, %v1105
  %v1109 = vmul.f32 %v1034, %v1105
  %v1110 = vmul.f32 %v1035, %v1105
  %v1111 = vmul.f32 %v1036, %v1105
  %v1112 = vmul.f32 %v1037, %v1105
  %v1113 = vmul.f32 %v1038, %v1105
  %v1114 = vmul.f32 %v1039, %v1105
  %v1115 = vmul.f32 %v1040, %v1105
  %v1116 = vmul.f32 %v1041, %v1105
  %v1117 = vmul.f32 %v1042, %v1105
  %v1118 = vmul.f32 %v1043, %v1105
  %v1119 = vmul.f32 %v1044, %v1105
  %v1120 = vmul.f32 %v1045, %v1105
  %v1121 = vmul.f32 %v1046, %v1105
  %v1122 = vmul.f32 %v1047, %v1105
  %v1123 = vld [vmem:[%s8] sm:$0xf]
  %1125 = vset.pattern.permute.xlu0 0
  %1126 = vperm.xlu0 %1125, %v1123
  %v1127 = vpop.permute.xlu0 %1126
  %v1129 = vadd.f32 %v1107, %v1127
  %v1130 = vadd.f32 %v1108, %v1127
  %v1131 = vadd.f32 %v1109, %v1127
  %v1132 = vadd.f32 %v1110, %v1127
  %v1133 = vadd.f32 %v1111, %v1127
  %v1134 = vadd.f32 %v1112, %v1127
  %v1135 = vadd.f32 %v1113, %v1127
  %v1136 = vadd.f32 %v1114, %v1127
  %v1137 = vadd.f32 %v1115, %v1127
  %v1138 = vadd.f32 %v1116, %v1127
  %v1139 = vadd.f32 %v1117, %v1127
  %v1140 = vadd.f32 %v1118, %v1127
  %v1141 = vadd.f32 %v1119, %v1127
  %v1142 = vadd.f32 %v1120, %v1127
  %v1143 = vadd.f32 %v1121, %v1127
  %v1144 = vadd.f32 %v1122, %v1127
  %v1145 = vmax.f32 %v1129, 0.0
  %v1146 = vmax.f32 %v1130, 0.0
  %v1147 = vmax.f32 %v1131, 0.0
  %v1148 = vmax.f32 %v1132, 0.0
  %v1149 = vmax.f32 %v1133, 0.0
  %v1150 = vmax.f32 %v1134, 0.0
  %v1151 = vmax.f32 %v1135, 0.0
  %v1152 = vmax.f32 %v1136, 0.0
  %v1153 = vmax.f32 %v1137, 0.0
  %v1154 = vmax.f32 %v1138, 0.0
  %v1155 = vmax.f32 %v1139, 0.0
  %v1156 = vmax.f32 %v1140, 0.0
  %v1157 = vmax.f32 %v1141, 0.0
  %v1158 = vmax.f32 %v1142, 0.0
  %v1159 = vmax.f32 %v1143, 0.0
  %v1160 = vmax.f32 %v1144, 0.0
  %v1161 = vld [vmem:[%s9] sm:$0xff]
  %vm1162 = vcmask 31744
  %v1164 = vsel %vm1162, %v1161, 0
  %v1167 = vsel %vm196, %v1145, 0
  %v1170 = vsel %vm196, %v1146, 0
  %v1173 = vsel %vm196, %v1147, 0
  %v1176 = vsel %vm196, %v1148, 0
  %v1179 = vsel %vm196, %v1149, 0
  %v1182 = vsel %vm196, %v1150, 0
  %v1185 = vsel %vm196, %v1151, 0
  %v1188 = vsel %vm196, %v1152, 0
  %v1191 = vsel %vm196, %v1153, 0
  %v1194 = vsel %vm196, %v1154, 0
  %v1197 = vsel %vm196, %v1155, 0
  %v1200 = vsel %vm196, %v1156, 0
  %v1203 = vsel %vm196, %v1157, 0
  %v1206 = vsel %vm196, %v1158, 0
  %v1209 = vsel %vm196, %v1159, 0
  %v1212 = vsel %vm196, %v1160, 0
  %1214 = vmatprep.subr.mxu0 %v1170
  %1215 = vmatpush1.msra.mxu0 %v1167
  %1216 = vmatprep.subr.mxu0 0.0
  %1217 = vmatpush1.msra.mxu0 0.0
  %1218 = vmatprep.subr.mxu0 0.0
  %1219 = vmatpush1.msra.mxu0 0.0
  %1220 = vmatprep.subr.mxu0 0.0
  %1221 = vmatpush1.msra.mxu0 0.0
  %1222 = vmatprep.subr.mxu0 0.0
  %1223 = vmatpush1.msra.mxu0 0.0
  %1224 = vmatprep.subr.mxu0 0.0
  %1225 = vmatpush1.msra.mxu0 0.0
  %1226 = vmatprep.subr.mxu0 0.0
  %1227 = vmatpush1.msra.mxu0 0.0
  %1228 = vmatprep.subr.mxu0 0.0
  %1229 = vmatpush1.msra.mxu0 0.0
  %1230 = vmatprep.subr.mxu0 0.0
  %1231 = vmatpush1.msra.mxu0 0.0
  %1232 = vmatprep.subr.mxu0 0.0
  %1233 = vmatpush1.msra.mxu0 0.0
  %1234 = vmatprep.subr.mxu0 0.0
  %1235 = vmatpush1.msra.mxu0 0.0
  %1236 = vmatprep.subr.mxu0 0.0
  %1237 = vmatpush1.msra.mxu0 0.0
  %1238 = vmatprep.subr.mxu0 0.0
  %1239 = vmatpush1.msra.mxu0 0.0
  %1240 = vmatprep.subr.mxu0 0.0
  %1241 = vmatpush1.msra.mxu0 0.0
  %1242 = vmatprep.subr.mxu0 0.0
  %1243 = vmatpush1.msra.mxu0 0.0
  %1244 = vmatprep.subr.mxu0 0.0
  %1245 = vmatpush1.msra.mxu0 0.0
  %1246 = vmatprep.subr.mxu0 0.0
  %1247 = vmatpush1.msra.mxu0 0.0
  %1248 = vmatprep.subr.mxu0 0.0
  %1249 = vmatpush1.msra.mxu0 0.0
  %1250 = vmatprep.subr.mxu0 0.0
  %1251 = vmatpush1.msra.mxu0 0.0
  %1252 = vmatprep.subr.mxu0 0.0
  %1253 = vmatpush1.msra.mxu0 0.0
  %1254 = vmatprep.subr.mxu0 0.0
  %1255 = vmatpush1.msra.mxu0 0.0
  %1256 = vmatprep.subr.mxu0 0.0
  %1257 = vmatpush1.msra.mxu0 0.0
  %1258 = vmatprep.subr.mxu0 0.0
  %1259 = vmatpush1.msra.mxu0 0.0
  %1260 = vmatprep.subr.mxu0 0.0
  %1261 = vmatpush1.msra.mxu0 0.0
  %1262 = vmatprep.subr.mxu0 0.0
  %1263 = vmatpush1.msra.mxu0 0.0
  %1264 = vmatprep.subr.mxu0 0.0
  %1265 = vmatpush1.msra.mxu0 0.0
  %1266 = vmatprep.subr.mxu0 0.0
  %1267 = vmatpush1.msra.mxu0 0.0
  %1268 = vmatprep.subr.mxu0 0.0
  %1269 = vmatpush1.msra.mxu0 0.0
  %1270 = vmatprep.subr.mxu0 0.0
  %1271 = vmatpush1.msra.mxu0 0.0
  %1272 = vmatprep.subr.mxu0 0.0
  %1273 = vmatpush1.msra.mxu0 0.0
  %1274 = vmatprep.subr.mxu0 0.0
  %1275 = vmatpush1.msra.mxu0 0.0
  %1276 = vmatprep.subr.mxu0 0.0
  %1277 = vmatpush1.msra.mxu0 0.0
  %1278 = vmatprep.mubr.f32.mxu0 0.0
  %1279 = vmatmul.mubr.f32.gmra.mrb[0].mxu0 %v1164
  %v1280 = vpop.f32.mrb[0].mxu0
  %v1281 = vadd.f32 0.0, %v1280
  %v1282 = vpop.f32.mrb[0].mxu0
  %v1283 = vadd.f32 0.0, %v1282
  %1284 = vdwg.mxu0
  %1285 = vmatprep.subr.mxu0 %v1176
  %1286 = vmatpush1.msra.mxu0 %v1173
  %1287 = vmatprep.subr.mxu0 0.0
  %1288 = vmatpush1.msra.mxu0 0.0
  %1289 = vmatprep.subr.mxu0 0.0
  %1290 = vmatpush1.msra.mxu0 0.0
  %1291 = vmatprep.subr.mxu0 0.0
  %1292 = vmatpush1.msra.mxu0 0.0
  %1293 = vmatprep.subr.mxu0 0.0
  %1294 = vmatpush1.msra.mxu0 0.0
  %1295 = vmatprep.subr.mxu0 0.0
  %1296 = vmatpush1.msra.mxu0 0.0
  %1297 = vmatprep.subr.mxu0 0.0
  %1298 = vmatpush1.msra.mxu0 0.0
  %1299 = vmatprep.subr.mxu0 0.0
  %1300 = vmatpush1.msra.mxu0 0.0
  %1301 = vmatprep.subr.mxu0 0.0
  %1302 = vmatpush1.msra.mxu0 0.0
  %1303 = vmatprep.subr.mxu0 0.0
  %1304 = vmatpush1.msra.mxu0 0.0
  %1305 = vmatprep.subr.mxu0 0.0
  %1306 = vmatpush1.msra.mxu0 0.0
  %1307 = vmatprep.subr.mxu0 0.0
  %1308 = vmatpush1.msra.mxu0 0.0
  %1309 = vmatprep.subr.mxu0 0.0
  %1310 = vmatpush1.msra.mxu0 0.0
  %1311 = vmatprep.subr.mxu0 0.0
  %1312 = vmatpush1.msra.mxu0 0.0
  %1313 = vmatprep.subr.mxu0 0.0
  %1314 = vmatpush1.msra.mxu0 0.0
  %1315 = vmatprep.subr.mxu0 0.0
  %1316 = vmatpush1.msra.mxu0 0.0
  %1317 = vmatprep.subr.mxu0 0.0
  %1318 = vmatpush1.msra.mxu0 0.0
  %1319 = vmatprep.subr.mxu0 0.0
  %1320 = vmatpush1.msra.mxu0 0.0
  %1321 = vmatprep.subr.mxu0 0.0
  %1322 = vmatpush1.msra.mxu0 0.0
  %1323 = vmatprep.subr.mxu0 0.0
  %1324 = vmatpush1.msra.mxu0 0.0
  %1325 = vmatprep.subr.mxu0 0.0
  %1326 = vmatpush1.msra.mxu0 0.0
  %1327 = vmatprep.subr.mxu0 0.0
  %1328 = vmatpush1.msra.mxu0 0.0
  %1329 = vmatprep.subr.mxu0 0.0
  %1330 = vmatpush1.msra.mxu0 0.0
  %1331 = vmatprep.subr.mxu0 0.0
  %1332 = vmatpush1.msra.mxu0 0.0
  %1333 = vmatprep.subr.mxu0 0.0
  %1334 = vmatpush1.msra.mxu0 0.0
  %1335 = vmatprep.subr.mxu0 0.0
  %1336 = vmatpush1.msra.mxu0 0.0
  %1337 = vmatprep.subr.mxu0 0.0
  %1338 = vmatpush1.msra.mxu0 0.0
  %1339 = vmatprep.subr.mxu0 0.0
  %1340 = vmatpush1.msra.mxu0 0.0
  %1341 = vmatprep.subr.mxu0 0.0
  %1342 = vmatpush1.msra.mxu0 0.0
  %1343 = vmatprep.subr.mxu0 0.0
  %1344 = vmatpush1.msra.mxu0 0.0
  %1345 = vmatprep.subr.mxu0 0.0
  %1346 = vmatpush1.msra.mxu0 0.0
  %1347 = vmatprep.subr.mxu0 0.0
  %1348 = vmatpush1.msra.mxu0 0.0
  %1349 = vmatprep.mubr.f32.mxu0 0.0
  %1350 = vmatmul.mubr.f32.gmra.mrb[0].mxu0 %v1164
  %v1351 = vpop.f32.mrb[0].mxu0
  %v1352 = vadd.f32 0.0, %v1351
  %v1353 = vpop.f32.mrb[0].mxu0
  %v1354 = vadd.f32 0.0, %v1353
  %1355 = vdwg.mxu0
  %1356 = vmatprep.subr.mxu0 %v1182
  %1357 = vmatpush1.msra.mxu0 %v1179
  %1358 = vmatprep.subr.mxu0 0.0
  %1359 = vmatpush1.msra.mxu0 0.0
  %1360 = vmatprep.subr.mxu0 0.0
  %1361 = vmatpush1.msra.mxu0 0.0
  %1362 = vmatprep.subr.mxu0 0.0
  %1363 = vmatpush1.msra.mxu0 0.0
  %1364 = vmatprep.subr.mxu0 0.0
  %1365 = vmatpush1.msra.mxu0 0.0
  %1366 = vmatprep.subr.mxu0 0.0
  %1367 = vmatpush1.msra.mxu0 0.0
  %1368 = vmatprep.subr.mxu0 0.0
  %1369 = vmatpush1.msra.mxu0 0.0
  %1370 = vmatprep.subr.mxu0 0.0
  %1371 = vmatpush1.msra.mxu0 0.0
  %1372 = vmatprep.subr.mxu0 0.0
  %1373 = vmatpush1.msra.mxu0 0.0
  %1374 = vmatprep.subr.mxu0 0.0
  %1375 = vmatpush1.msra.mxu0 0.0
  %1376 = vmatprep.subr.mxu0 0.0
  %1377 = vmatpush1.msra.mxu0 0.0
  %1378 = vmatprep.subr.mxu0 0.0
  %1379 = vmatpush1.msra.mxu0 0.0
  %1380 = vmatprep.subr.mxu0 0.0
  %1381 = vmatpush1.msra.mxu0 0.0
  %1382 = vmatprep.subr.mxu0 0.0
  %1383 = vmatpush1.msra.mxu0 0.0
  %1384 = vmatprep.subr.mxu0 0.0
  %1385 = vmatpush1.msra.mxu0 0.0
  %1386 = vmatprep.subr.mxu0 0.0
  %1387 = vmatpush1.msra.mxu0 0.0
  %1388 = vmatprep.subr.mxu0 0.0
  %1389 = vmatpush1.msra.mxu0 0.0
  %1390 = vmatprep.subr.mxu0 0.0
  %1391 = vmatpush1.msra.mxu0 0.0
  %1392 = vmatprep.subr.mxu0 0.0
  %1393 = vmatpush1.msra.mxu0 0.0
  %1394 = vmatprep.subr.mxu0 0.0
  %1395 = vmatpush1.msra.mxu0 0.0
  %1396 = vmatprep.subr.mxu0 0.0
  %1397 = vmatpush1.msra.mxu0 0.0
  %1398 = vmatprep.subr.mxu0 0.0
  %1399 = vmatpush1.msra.mxu0 0.0
  %1400 = vmatprep.subr.mxu0 0.0
  %1401 = vmatpush1.msra.mxu0 0.0
  %1402 = vmatprep.subr.mxu0 0.0
  %1403 = vmatpush1.msra.mxu0 0.0
  %1404 = vmatprep.subr.mxu0 0.0
  %1405 = vmatpush1.msra.mxu0 0.0
  %1406 = vmatprep.subr.mxu0 0.0
  %1407 = vmatpush1.msra.mxu0 0.0
  %1408 = vmatprep.subr.mxu0 0.0
  %1409 = vmatpush1.msra.mxu0 0.0
  %1410 = vmatprep.subr.mxu0 0.0
  %1411 = vmatpush1.msra.mxu0 0.0
  %1412 = vmatprep.subr.mxu0 0.0
  %1413 = vmatpush1.msra.mxu0 0.0
  %1414 = vmatprep.subr.mxu0 0.0
  %1415 = vmatpush1.msra.mxu0 0.0
  %1416 = vmatprep.subr.mxu0 0.0
  %1417 = vmatpush1.msra.mxu0 0.0
  %1418 = vmatprep.subr.mxu0 0.0
  %1419 = vmatpush1.msra.mxu0 0.0
  %1420 = vmatprep.mubr.f32.mxu0 0.0
  %1421 = vmatmul.mubr.f32.gmra.mrb[0].mxu0 %v1164
  %v1422 = vpop.f32.mrb[0].mxu0
  %v1423 = vadd.f32 0.0, %v1422
  %v1424 = vpop.f32.mrb[0].mxu0
  %v1425 = vadd.f32 0.0, %v1424
  %1426 = vdwg.mxu0
  %1427 = vmatprep.subr.mxu0 %v1188
  %1428 = vmatpush1.msra.mxu0 %v1185
  %1429 = vmatprep.subr.mxu0 0.0
  %1430 = vmatpush1.msra.mxu0 0.0
  %1431 = vmatprep.subr.mxu0 0.0
  %1432 = vmatpush1.msra.mxu0 0.0
  %1433 = vmatprep.subr.mxu0 0.0
  %1434 = vmatpush1.msra.mxu0 0.0
  %1435 = vmatprep.subr.mxu0 0.0
  %1436 = vmatpush1.msra.mxu0 0.0
  %1437 = vmatprep.subr.mxu0 0.0
  %1438 = vmatpush1.msra.mxu0 0.0
  %1439 = vmatprep.subr.mxu0 0.0
  %1440 = vmatpush1.msra.mxu0 0.0
  %1441 = vmatprep.subr.mxu0 0.0
  %1442 = vmatpush1.msra.mxu0 0.0
  %1443 = vmatprep.subr.mxu0 0.0
  %1444 = vmatpush1.msra.mxu0 0.0
  %1445 = vmatprep.subr.mxu0 0.0
  %1446 = vmatpush1.msra.mxu0 0.0
  %1447 = vmatprep.subr.mxu0 0.0
  %1448 = vmatpush1.msra.mxu0 0.0
  %1449 = vmatprep.subr.mxu0 0.0
  %1450 = vmatpush1.msra.mxu0 0.0
  %1451 = vmatprep.subr.mxu0 0.0
  %1452 = vmatpush1.msra.mxu0 0.0
  %1453 = vmatprep.subr.mxu0 0.0
  %1454 = vmatpush1.msra.mxu0 0.0
  %1455 = vmatprep.subr.mxu0 0.0
  %1456 = vmatpush1.msra.mxu0 0.0
  %1457 = vmatprep.subr.mxu0 0.0
  %1458 = vmatpush1.msra.mxu0 0.0
  %1459 = vmatprep.subr.mxu0 0.0
  %1460 = vmatpush1.msra.mxu0 0.0
  %1461 = vmatprep.subr.mxu0 0.0
  %1462 = vmatpush1.msra.mxu0 0.0
  %1463 = vmatprep.subr.mxu0 0.0
  %1464 = vmatpush1.msra.mxu0 0.0
  %1465 = vmatprep.subr.mxu0 0.0
  %1466 = vmatpush1.msra.mxu0 0.0
  %1467 = vmatprep.subr.mxu0 0.0
  %1468 = vmatpush1.msra.mxu0 0.0
  %1469 = vmatprep.subr.mxu0 0.0
  %1470 = vmatpush1.msra.mxu0 0.0
  %1471 = vmatprep.subr.mxu0 0.0
  %1472 = vmatpush1.msra.mxu0 0.0
  %1473 = vmatprep.subr.mxu0 0.0
  %1474 = vmatpush1.msra.mxu0 0.0
  %1475 = vmatprep.subr.mxu0 0.0
  %1476 = vmatpush1.msra.mxu0 0.0
  %1477 = vmatprep.subr.mxu0 0.0
  %1478 = vmatpush1.msra.mxu0 0.0
  %1479 = vmatprep.subr.mxu0 0.0
  %1480 = vmatpush1.msra.mxu0 0.0
  %1481 = vmatprep.subr.mxu0 0.0
  %1482 = vmatpush1.msra.mxu0 0.0
  %1483 = vmatprep.subr.mxu0 0.0
  %1484 = vmatpush1.msra.mxu0 0.0
  %1485 = vmatprep.subr.mxu0 0.0
  %1486 = vmatpush1.msra.mxu0 0.0
  %1487 = vmatprep.subr.mxu0 0.0
  %1488 = vmatpush1.msra.mxu0 0.0
  %1489 = vmatprep.subr.mxu0 0.0
  %1490 = vmatpush1.msra.mxu0 0.0
  %1491 = vmatprep.mubr.f32.mxu0 0.0
  %1492 = vmatmul.mubr.f32.gmra.mrb[0].mxu0 %v1164
  %v1493 = vpop.f32.mrb[0].mxu0
  %v1494 = vadd.f32 0.0, %v1493
  %v1495 = vpop.f32.mrb[0].mxu0
  %v1496 = vadd.f32 0.0, %v1495
  %1497 = vdwg.mxu0
  %1498 = vmatprep.subr.mxu0 %v1194
  %1499 = vmatpush1.msra.mxu0 %v1191
  %1500 = vmatprep.subr.mxu0 0.0
  %1501 = vmatpush1.msra.mxu0 0.0
  %1502 = vmatprep.subr.mxu0 0.0
  %1503 = vmatpush1.msra.mxu0 0.0
  %1504 = vmatprep.subr.mxu0 0.0
  %1505 = vmatpush1.msra.mxu0 0.0
  %1506 = vmatprep.subr.mxu0 0.0
  %1507 = vmatpush1.msra.mxu0 0.0
  %1508 = vmatprep.subr.mxu0 0.0
  %1509 = vmatpush1.msra.mxu0 0.0
  %1510 = vmatprep.subr.mxu0 0.0
  %1511 = vmatpush1.msra.mxu0 0.0
  %1512 = vmatprep.subr.mxu0 0.0
  %1513 = vmatpush1.msra.mxu0 0.0
  %1514 = vmatprep.subr.mxu0 0.0
  %1515 = vmatpush1.msra.mxu0 0.0
  %1516 = vmatprep.subr.mxu0 0.0
  %1517 = vmatpush1.msra.mxu0 0.0
  %1518 = vmatprep.subr.mxu0 0.0
  %1519 = vmatpush1.msra.mxu0 0.0
  %1520 = vmatprep.subr.mxu0 0.0
  %1521 = vmatpush1.msra.mxu0 0.0
  %1522 = vmatprep.subr.mxu0 0.0
  %1523 = vmatpush1.msra.mxu0 0.0
  %1524 = vmatprep.subr.mxu0 0.0
  %1525 = vmatpush1.msra.mxu0 0.0
  %1526 = vmatprep.subr.mxu0 0.0
  %1527 = vmatpush1.msra.mxu0 0.0
  %1528 = vmatprep.subr.mxu0 0.0
  %1529 = vmatpush1.msra.mxu0 0.0
  %1530 = vmatprep.subr.mxu0 0.0
  %1531 = vmatpush1.msra.mxu0 0.0
  %1532 = vmatprep.subr.mxu0 0.0
  %1533 = vmatpush1.msra.mxu0 0.0
  %1534 = vmatprep.subr.mxu0 0.0
  %1535 = vmatpush1.msra.mxu0 0.0
  %1536 = vmatprep.subr.mxu0 0.0
  %1537 = vmatpush1.msra.mxu0 0.0
  %1538 = vmatprep.subr.mxu0 0.0
  %1539 = vmatpush1.msra.mxu0 0.0
  %1540 = vmatprep.subr.mxu0 0.0
  %1541 = vmatpush1.msra.mxu0 0.0
  %1542 = vmatprep.subr.mxu0 0.0
  %1543 = vmatpush1.msra.mxu0 0.0
  %1544 = vmatprep.subr.mxu0 0.0
  %1545 = vmatpush1.msra.mxu0 0.0
  %1546 = vmatprep.subr.mxu0 0.0
  %1547 = vmatpush1.msra.mxu0 0.0
  %1548 = vmatprep.subr.mxu0 0.0
  %1549 = vmatpush1.msra.mxu0 0.0
  %1550 = vmatprep.subr.mxu0 0.0
  %1551 = vmatpush1.msra.mxu0 0.0
  %1552 = vmatprep.subr.mxu0 0.0
  %1553 = vmatpush1.msra.mxu0 0.0
  %1554 = vmatprep.subr.mxu0 0.0
  %1555 = vmatpush1.msra.mxu0 0.0
  %1556 = vmatprep.subr.mxu0 0.0
  %1557 = vmatpush1.msra.mxu0 0.0
  %1558 = vmatprep.subr.mxu0 0.0
  %1559 = vmatpush1.msra.mxu0 0.0
  %1560 = vmatprep.subr.mxu0 0.0
  %1561 = vmatpush1.msra.mxu0 0.0
  %1562 = vmatprep.mubr.f32.mxu0 0.0
  %1563 = vmatmul.mubr.f32.gmra.mrb[0].mxu0 %v1164
  %v1564 = vpop.f32.mrb[0].mxu0
  %v1565 = vadd.f32 0.0, %v1564
  %v1566 = vpop.f32.mrb[0].mxu0
  %v1567 = vadd.f32 0.0, %v1566
  %1568 = vdwg.mxu0
  %1569 = vmatprep.subr.mxu0 %v1200
  %1570 = vmatpush1.msra.mxu0 %v1197
  %1571 = vmatprep.subr.mxu0 0.0
  %1572 = vmatpush1.msra.mxu0 0.0
  %1573 = vmatprep.subr.mxu0 0.0
  %1574 = vmatpush1.msra.mxu0 0.0
  %1575 = vmatprep.subr.mxu0 0.0
  %1576 = vmatpush1.msra.mxu0 0.0
  %1577 = vmatprep.subr.mxu0 0.0
  %1578 = vmatpush1.msra.mxu0 0.0
  %1579 = vmatprep.subr.mxu0 0.0
  %1580 = vmatpush1.msra.mxu0 0.0
  %1581 = vmatprep.subr.mxu0 0.0
  %1582 = vmatpush1.msra.mxu0 0.0
  %1583 = vmatprep.subr.mxu0 0.0
  %1584 = vmatpush1.msra.mxu0 0.0
  %1585 = vmatprep.subr.mxu0 0.0
  %1586 = vmatpush1.msra.mxu0 0.0
  %1587 = vmatprep.subr.mxu0 0.0
  %1588 = vmatpush1.msra.mxu0 0.0
  %1589 = vmatprep.subr.mxu0 0.0
  %1590 = vmatpush1.msra.mxu0 0.0
  %1591 = vmatprep.subr.mxu0 0.0
  %1592 = vmatpush1.msra.mxu0 0.0
  %1593 = vmatprep.subr.mxu0 0.0
  %1594 = vmatpush1.msra.mxu0 0.0
  %1595 = vmatprep.subr.mxu0 0.0
  %1596 = vmatpush1.msra.mxu0 0.0
  %1597 = vmatprep.subr.mxu0 0.0
  %1598 = vmatpush1.msra.mxu0 0.0
  %1599 = vmatprep.subr.mxu0 0.0
  %1600 = vmatpush1.msra.mxu0 0.0
  %1601 = vmatprep.subr.mxu0 0.0
  %1602 = vmatpush1.msra.mxu0 0.0
  %1603 = vmatprep.subr.mxu0 0.0
  %1604 = vmatpush1.msra.mxu0 0.0
  %1605 = vmatprep.subr.mxu0 0.0
  %1606 = vmatpush1.msra.mxu0 0.0
  %1607 = vmatprep.subr.mxu0 0.0
  %1608 = vmatpush1.msra.mxu0 0.0
  %1609 = vmatprep.subr.mxu0 0.0
  %1610 = vmatpush1.msra.mxu0 0.0
  %1611 = vmatprep.subr.mxu0 0.0
  %1612 = vmatpush1.msra.mxu0 0.0
  %1613 = vmatprep.subr.mxu0 0.0
  %1614 = vmatpush1.msra.mxu0 0.0
  %1615 = vmatprep.subr.mxu0 0.0
  %1616 = vmatpush1.msra.mxu0 0.0
  %1617 = vmatprep.subr.mxu0 0.0
  %1618 = vmatpush1.msra.mxu0 0.0
  %1619 = vmatprep.subr.mxu0 0.0
  %1620 = vmatpush1.msra.mxu0 0.0
  %1621 = vmatprep.subr.mxu0 0.0
  %1622 = vmatpush1.msra.mxu0 0.0
  %1623 = vmatprep.subr.mxu0 0.0
  %1624 = vmatpush1.msra.mxu0 0.0
  %1625 = vmatprep.subr.mxu0 0.0
  %1626 = vmatpush1.msra.mxu0 0.0
  %1627 = vmatprep.subr.mxu0 0.0
  %1628 = vmatpush1.msra.mxu0 0.0
  %1629 = vmatprep.subr.mxu0 0.0
  %1630 = vmatpush1.msra.mxu0 0.0
  %1631 = vmatprep.subr.mxu0 0.0
  %1632 = vmatpush1.msra.mxu0 0.0
  %1633 = vmatprep.mubr.f32.mxu0 0.0
  %1634 = vmatmul.mubr.f32.gmra.mrb[0].mxu0 %v1164
  %v1635 = vpop.f32.mrb[0].mxu0
  %v1636 = vadd.f32 0.0, %v1635
  %v1637 = vpop.f32.mrb[0].mxu0
  %v1638 = vadd.f32 0.0, %v1637
  %1639 = vdwg.mxu0
  %1640 = vmatprep.subr.mxu0 %v1206
  %1641 = vmatpush1.msra.mxu0 %v1203
  %1642 = vmatprep.subr.mxu0 0.0
  %1643 = vmatpush1.msra.mxu0 0.0
  %1644 = vmatprep.subr.mxu0 0.0
  %1645 = vmatpush1.msra.mxu0 0.0
  %1646 = vmatprep.subr.mxu0 0.0
  %1647 = vmatpush1.msra.mxu0 0.0
  %1648 = vmatprep.subr.mxu0 0.0
  %1649 = vmatpush1.msra.mxu0 0.0
  %1650 = vmatprep.subr.mxu0 0.0
  %1651 = vmatpush1.msra.mxu0 0.0
  %1652 = vmatprep.subr.mxu0 0.0
  %1653 = vmatpush1.msra.mxu0 0.0
  %1654 = vmatprep.subr.mxu0 0.0
  %1655 = vmatpush1.msra.mxu0 0.0
  %1656 = vmatprep.subr.mxu0 0.0
  %1657 = vmatpush1.msra.mxu0 0.0
  %1658 = vmatprep.subr.mxu0 0.0
  %1659 = vmatpush1.msra.mxu0 0.0
  %1660 = vmatprep.subr.mxu0 0.0
  %1661 = vmatpush1.msra.mxu0 0.0
  %1662 = vmatprep.subr.mxu0 0.0
  %1663 = vmatpush1.msra.mxu0 0.0
  %1664 = vmatprep.subr.mxu0 0.0
  %1665 = vmatpush1.msra.mxu0 0.0
  %1666 = vmatprep.subr.mxu0 0.0
  %1667 = vmatpush1.msra.mxu0 0.0
  %1668 = vmatprep.subr.mxu0 0.0
  %1669 = vmatpush1.msra.mxu0 0.0
  %1670 = vmatprep.subr.mxu0 0.0
  %1671 = vmatpush1.msra.mxu0 0.0
  %1672 = vmatprep.subr.mxu0 0.0
  %1673 = vmatpush1.msra.mxu0 0.0
  %1674 = vmatprep.subr.mxu0 0.0
  %1675 = vmatpush1.msra.mxu0 0.0
  %1676 = vmatprep.subr.mxu0 0.0
  %1677 = vmatpush1.msra.mxu0 0.0
  %1678 = vmatprep.subr.mxu0 0.0
  %1679 = vmatpush1.msra.mxu0 0.0
  %1680 = vmatprep.subr.mxu0 0.0
  %1681 = vmatpush1.msra.mxu0 0.0
  %1682 = vmatprep.subr.mxu0 0.0
  %1683 = vmatpush1.msra.mxu0 0.0
  %1684 = vmatprep.subr.mxu0 0.0
  %1685 = vmatpush1.msra.mxu0 0.0
  %1686 = vmatprep.subr.mxu0 0.0
  %1687 = vmatpush1.msra.mxu0 0.0
  %1688 = vmatprep.subr.mxu0 0.0
  %1689 = vmatpush1.msra.mxu0 0.0
  %1690 = vmatprep.subr.mxu0 0.0
  %1691 = vmatpush1.msra.mxu0 0.0
  %1692 = vmatprep.subr.mxu0 0.0
  %1693 = vmatpush1.msra.mxu0 0.0
  %1694 = vmatprep.subr.mxu0 0.0
  %1695 = vmatpush1.msra.mxu0 0.0
  %1696 = vmatprep.subr.mxu0 0.0
  %1697 = vmatpush1.msra.mxu0 0.0
  %1698 = vmatprep.subr.mxu0 0.0
  %1699 = vmatpush1.msra.mxu0 0.0
  %1700 = vmatprep.subr.mxu0 0.0
  %1701 = vmatpush1.msra.mxu0 0.0
  %1702 = vmatprep.subr.mxu0 0.0
  %1703 = vmatpush1.msra.mxu0 0.0
  %1704 = vmatprep.mubr.f32.mxu0 0.0
  %1705 = vmatmul.mubr.f32.gmra.mrb[0].mxu0 %v1164
  %v1706 = vpop.f32.mrb[0].mxu0
  %v1707 = vadd.f32 0.0, %v1706
  %v1708 = vpop.f32.mrb[0].mxu0
  %v1709 = vadd.f32 0.0, %v1708
  %1710 = vdwg.mxu0
  %1711 = vmatprep.subr.mxu0 %v1212
  %1712 = vmatpush1.msra.mxu0 %v1209
  %1713 = vmatprep.subr.mxu0 0.0
  %1714 = vmatpush1.msra.mxu0 0.0
  %1715 = vmatprep.subr.mxu0 0.0
  %1716 = vmatpush1.msra.mxu0 0.0
  %1717 = vmatprep.subr.mxu0 0.0
  %1718 = vmatpush1.msra.mxu0 0.0
  %1719 = vmatprep.subr.mxu0 0.0
  %1720 = vmatpush1.msra.mxu0 0.0
  %1721 = vmatprep.subr.mxu0 0.0
  %1722 = vmatpush1.msra.mxu0 0.0
  %1723 = vmatprep.subr.mxu0 0.0
  %1724 = vmatpush1.msra.mxu0 0.0
  %1725 = vmatprep.subr.mxu0 0.0
  %1726 = vmatpush1.msra.mxu0 0.0
  %1727 = vmatprep.subr.mxu0 0.0
  %1728 = vmatpush1.msra.mxu0 0.0
  %1729 = vmatprep.subr.mxu0 0.0
  %1730 = vmatpush1.msra.mxu0 0.0
  %1731 = vmatprep.subr.mxu0 0.0
  %1732 = vmatpush1.msra.mxu0 0.0
  %1733 = vmatprep.subr.mxu0 0.0
  %1734 = vmatpush1.msra.mxu0 0.0
  %1735 = vmatprep.subr.mxu0 0.0
  %1736 = vmatpush1.msra.mxu0 0.0
  %1737 = vmatprep.subr.mxu0 0.0
  %1738 = vmatpush1.msra.mxu0 0.0
  %1739 = vmatprep.subr.mxu0 0.0
  %1740 = vmatpush1.msra.mxu0 0.0
  %1741 = vmatprep.subr.mxu0 0.0
  %1742 = vmatpush1.msra.mxu0 0.0
  %1743 = vmatprep.subr.mxu0 0.0
  %1744 = vmatpush1.msra.mxu0 0.0
  %1745 = vmatprep.subr.mxu0 0.0
  %1746 = vmatpush1.msra.mxu0 0.0
  %1747 = vmatprep.subr.mxu0 0.0
  %1748 = vmatpush1.msra.mxu0 0.0
  %1749 = vmatprep.subr.mxu0 0.0
  %1750 = vmatpush1.msra.mxu0 0.0
  %1751 = vmatprep.subr.mxu0 0.0
  %1752 = vmatpush1.msra.mxu0 0.0
  %1753 = vmatprep.subr.mxu0 0.0
  %1754 = vmatpush1.msra.mxu0 0.0
  %1755 = vmatprep.subr.mxu0 0.0
  %1756 = vmatpush1.msra.mxu0 0.0
  %1757 = vmatprep.subr.mxu0 0.0
  %1758 = vmatpush1.msra.mxu0 0.0
  %1759 = vmatprep.subr.mxu0 0.0
  %1760 = vmatpush1.msra.mxu0 0.0
  %1761 = vmatprep.subr.mxu0 0.0
  %1762 = vmatpush1.msra.mxu0 0.0
  %1763 = vmatprep.subr.mxu0 0.0
  %1764 = vmatpush1.msra.mxu0 0.0
  %1765 = vmatprep.subr.mxu0 0.0
  %1766 = vmatpush1.msra.mxu0 0.0
  %1767 = vmatprep.subr.mxu0 0.0
  %1768 = vmatpush1.msra.mxu0 0.0
  %1769 = vmatprep.subr.mxu0 0.0
  %1770 = vmatpush1.msra.mxu0 0.0
  %1771 = vmatprep.subr.mxu0 0.0
  %1772 = vmatpush1.msra.mxu0 0.0
  %1773 = vmatprep.subr.mxu0 0.0
  %1774 = vmatpush1.msra.mxu0 0.0
  %1775 = vmatprep.mubr.f32.mxu0 0.0
  %1776 = vmatmul.mubr.f32.gmra.mrb[0].mxu0 %v1164
  %v1777 = vpop.f32.mrb[0].mxu0
  %v1778 = vadd.f32 0.0, %v1777
  %v1779 = vpop.f32.mrb[0].mxu0
  %v1780 = vadd.f32 0.0, %v1779
  %1781 = vdwg.mxu0
  %v1782 = vadd.f32 %v1281, %v1283
  %v1783 = vadd.f32 %v1782, %v1352
  %v1784 = vadd.f32 %v1783, %v1354
  %v1785 = vadd.f32 %v1784, %v1423
  %v1786 = vadd.f32 %v1785, %v1425
  %v1787 = vadd.f32 %v1786, %v1494
  %v1788 = vadd.f32 %v1787, %v1496
  %v1789 = vadd.f32 %v1788, %v1565
  %v1790 = vadd.f32 %v1789, %v1567
  %v1791 = vadd.f32 %v1790, %v1636
  %v1792 = vadd.f32 %v1791, %v1638
  %v1793 = vadd.f32 %v1792, %v1707
  %v1794 = vadd.f32 %v1793, %v1709
  %v1795 = vadd.f32 %v1794, %v1778
  %v1796 = vadd.f32 %v1795, %v1780
  %1797 = vadd.xlane.f32.xlu0 %v1796
  %v1798 = vpop.xlane.xlu0 %1797
  %v1799 = vmul.f32 %v1798, 0.00048828125
  %v1800 = vsub.f32 %v1281, %v1799
  %v1801 = vsub.f32 %v1283, %v1799
  %v1802 = vsub.f32 %v1352, %v1799
  %v1803 = vsub.f32 %v1354, %v1799
  %v1804 = vsub.f32 %v1423, %v1799
  %v1805 = vsub.f32 %v1425, %v1799
  %v1806 = vsub.f32 %v1494, %v1799
  %v1807 = vsub.f32 %v1496, %v1799
  %v1808 = vsub.f32 %v1565, %v1799
  %v1809 = vsub.f32 %v1567, %v1799
  %v1810 = vsub.f32 %v1636, %v1799
  %v1811 = vsub.f32 %v1638, %v1799
  %v1812 = vsub.f32 %v1707, %v1799
  %v1813 = vsub.f32 %v1709, %v1799
  %v1814 = vsub.f32 %v1778, %v1799
  %v1815 = vsub.f32 %v1780, %v1799
  %v1816 = vmul.f32 %v1800, %v1800
  %v1817 = vmul.f32 %v1801, %v1801
  %v1818 = vmul.f32 %v1802, %v1802
  %v1819 = vmul.f32 %v1803, %v1803
  %v1820 = vmul.f32 %v1804, %v1804
  %v1821 = vmul.f32 %v1805, %v1805
  %v1822 = vmul.f32 %v1806, %v1806
  %v1823 = vmul.f32 %v1807, %v1807
  %v1824 = vmul.f32 %v1808, %v1808
  %v1825 = vmul.f32 %v1809, %v1809
  %v1826 = vmul.f32 %v1810, %v1810
  %v1827 = vmul.f32 %v1811, %v1811
  %v1828 = vmul.f32 %v1812, %v1812
  %v1829 = vmul.f32 %v1813, %v1813
  %v1830 = vmul.f32 %v1814, %v1814
  %v1831 = vmul.f32 %v1815, %v1815
  %v1832 = vadd.f32 %v1816, %v1817
  %v1833 = vadd.f32 %v1832, %v1818
  %v1834 = vadd.f32 %v1833, %v1819
  %v1835 = vadd.f32 %v1834, %v1820
  %v1836 = vadd.f32 %v1835, %v1821
  %v1837 = vadd.f32 %v1836, %v1822
  %v1838 = vadd.f32 %v1837, %v1823
  %v1839 = vadd.f32 %v1838, %v1824
  %v1840 = vadd.f32 %v1839, %v1825
  %v1841 = vadd.f32 %v1840, %v1826
  %v1842 = vadd.f32 %v1841, %v1827
  %v1843 = vadd.f32 %v1842, %v1828
  %v1844 = vadd.f32 %v1843, %v1829
  %v1845 = vadd.f32 %v1844, %v1830
  %v1846 = vadd.f32 %v1845, %v1831
  %1847 = vadd.xlane.f32.xlu0 %v1846
  %v1848 = vpop.xlane.xlu0 %1847
  %v1849 = vmul.f32 %v1848, 0.00048828125
  %v1850 = vld [vmem:[%s10] sm:$0xff]
  %v1851 = vadd.f32 %v1849, 1e-05
  %v1852 = vrsqrt.pop %v1851
  %v1853 = vmul.f32 %v1850, %v1852
  %1855 = vset.pattern.permute.xlu0 0
  %1856 = vperm.xlu0 %1855, %v1853
  %v1857 = vpop.permute.xlu0 %1856
  %v1859 = vmul.f32 %v1800, %v1857
  %v1860 = vmul.f32 %v1801, %v1857
  %v1861 = vmul.f32 %v1802, %v1857
  %v1862 = vmul.f32 %v1803, %v1857
  %v1863 = vmul.f32 %v1804, %v1857
  %v1864 = vmul.f32 %v1805, %v1857
  %v1865 = vmul.f32 %v1806, %v1857
  %v1866 = vmul.f32 %v1807, %v1857
  %v1867 = vmul.f32 %v1808, %v1857
  %v1868 = vmul.f32 %v1809, %v1857
  %v1869 = vmul.f32 %v1810, %v1857
  %v1870 = vmul.f32 %v1811, %v1857
  %v1871 = vmul.f32 %v1812, %v1857
  %v1872 = vmul.f32 %v1813, %v1857
  %v1873 = vmul.f32 %v1814, %v1857
  %v1874 = vmul.f32 %v1815, %v1857
  %v1875 = vld [vmem:[%s11] sm:$0xff]
  %1877 = vset.pattern.permute.xlu0 0
  %1878 = vperm.xlu0 %1877, %v1875
  %v1879 = vpop.permute.xlu0 %1878
  %v1881 = vadd.f32 %v1859, %v1879
  %v1882 = vadd.f32 %v1860, %v1879
  %v1883 = vadd.f32 %v1861, %v1879
  %v1884 = vadd.f32 %v1862, %v1879
  %v1885 = vadd.f32 %v1863, %v1879
  %v1886 = vadd.f32 %v1864, %v1879
  %v1887 = vadd.f32 %v1865, %v1879
  %v1888 = vadd.f32 %v1866, %v1879
  %v1889 = vadd.f32 %v1867, %v1879
  %v1890 = vadd.f32 %v1868, %v1879
  %v1891 = vadd.f32 %v1869, %v1879
  %v1892 = vadd.f32 %v1870, %v1879
  %v1893 = vadd.f32 %v1871, %v1879
  %v1894 = vadd.f32 %v1872, %v1879
  %v1895 = vadd.f32 %v1873, %v1879
  %v1896 = vadd.f32 %v1874, %v1879
  %v1897 = vmax.f32 %v1881, 0.0
  %v1898 = vmax.f32 %v1882, 0.0
  %v1899 = vmax.f32 %v1883, 0.0
  %v1900 = vmax.f32 %v1884, 0.0
  %v1901 = vmax.f32 %v1885, 0.0
  %v1902 = vmax.f32 %v1886, 0.0
  %v1903 = vmax.f32 %v1887, 0.0
  %v1904 = vmax.f32 %v1888, 0.0
  %v1905 = vmax.f32 %v1889, 0.0
  %v1906 = vmax.f32 %v1890, 0.0
  %v1907 = vmax.f32 %v1891, 0.0
  %v1908 = vmax.f32 %v1892, 0.0
  %v1909 = vmax.f32 %v1893, 0.0
  %v1910 = vmax.f32 %v1894, 0.0
  %v1911 = vmax.f32 %v1895, 0.0
  %v1912 = vmax.f32 %v1896, 0.0
  %1913 = vst [vmem:[%s12] sm:$0xff] %v1897
  %1914 = vst [vmem:[%s12 + $0x8] sm:$0xff] %v1898
  %1915 = vst [vmem:[%s12 + $0x10] sm:$0xff] %v1899
  %1916 = vst [vmem:[%s12 + $0x18] sm:$0xff] %v1900
  %1917 = vst [vmem:[%s12 + $0x20] sm:$0xff] %v1901
  %1918 = vst [vmem:[%s12 + $0x28] sm:$0xff] %v1902
  %1919 = vst [vmem:[%s12 + $0x30] sm:$0xff] %v1903
  %1920 = vst [vmem:[%s12 + $0x38] sm:$0xff] %v1904
  %1921 = vst [vmem:[%s12 + $0x40] sm:$0xff] %v1905
  %1922 = vst [vmem:[%s12 + $0x48] sm:$0xff] %v1906
  %1923 = vst [vmem:[%s12 + $0x50] sm:$0xff] %v1907
  %1924 = vst [vmem:[%s12 + $0x58] sm:$0xff] %v1908
  %1925 = vst [vmem:[%s12 + $0x60] sm:$0xff] %v1909
  %1926 = vst [vmem:[%s12 + $0x68] sm:$0xff] %v1910
  %1927 = vst [vmem:[%s12 + $0x70] sm:$0xff] %v1911
  %1928 = vst [vmem:[%s12 + $0x78] sm:$0xff] %v1912
  // Predicated region
  $region50: #{decoder_forward.1} parent=0 // pred_check
    _
  $region51: #{decoder_forward.1} parent=0 // pred_check_branch
    %1930 = sbr.rel (0) target = $region53
  $region52: #{decoder_forward.1} parent=0 // pred_region
    _
  $region53: #{decoder_forward.1} parent=0 // pred_fallthru
    _
  // Predicated region
  $region54: #{decoder_forward.1} parent=0 // pred_check
    _
  $region55: #{decoder_forward.1} parent=0 // pred_check_branch
    %1932 = sbr.rel (0) target = $region57
  $region56: #{decoder_forward.1} parent=0 // pred_region
    _
  $region57: #{decoder_forward.1} parent=0 // pred_fallthru
    _

</llo_original>
